<compile_context>
chip_gen: v7x
topology: tpu7x:2x2x1
jax: 0.10.0
libtpu: 0.0.40
codegen_flags: <defaults>
</compile_context>

<pallas_src>
from functools import lru_cache

import numpy as np
import jax
import jax.numpy as jnp
from jax.experimental import pallas as pl
from jax.experimental.pallas import tpu as pltpu


@lru_cache(maxsize=None)
def _bilinear_up2_matrix(size_in: int) -> np.ndarray:
    """(2*size_in, size_in) matrix U s.t. U @ v == 2x bilinear upsample of v with
    PyTorch nn.Upsample(scale_factor=2, mode='bilinear', align_corners=False)
    semantics (half-pixel centers, source index clamped to [0, size_in-1])."""
    size_out = 2 * size_in
    d = np.arange(size_out)
    src = (d + 0.5) / 2.0 - 0.5
    src = np.clip(src, 0.0, None)          # PyTorch clamps negative source index to 0
    i0 = np.floor(src).astype(np.int64)
    frac = (src - i0).astype(np.float32)
    i1 = np.minimum(i0 + 1, size_in - 1)   # right-edge clamp
    U = np.zeros((size_out, size_in), dtype=np.float32)
    U[d, i0] += (1.0 - frac)
    U[d, i1] += frac
    return U


def _skip_upsample_kernel(w_ref, uh_ref, uwt_ref, x_ref, y_ref, o_ref):
    # w_ref  : (Cout, Cin)      1x1 conv weight, in SMEM (scalar reads)
    # uh_ref : (2H, H)          height upsample operator
    # uwt_ref: (W, 2W)          width  upsample operator (transposed)
    # x_ref  : (Cin*H, W)       one batch item, channels folded into sublanes
    # y_ref  : (Cout*2H, 2W)    one batch item of the skip tensor
    # o_ref  : (Cout*2H, 2W)
    cout, cin = w_ref.shape
    h2, h = uh_ref.shape

    # 1) 2x width upsample of every (channel, row) of x in ONE MXU matmul.
    #    M = Cin*H keeps the systolic array busy (feedback: avoid M=8 pushes).
    xw = jnp.dot(x_ref[...], uwt_ref[...],
                 preferred_element_type=jnp.float32)          # (Cin*H, 2W)

    # 2) Per output channel: 1x1 conv (scalar-weighted sum over input channels,
    #    VPU work on small tiles), 2x height upsample (one small MXU matmul),
    #    residual add, store.  Cout/Cin are small static ints -> unrolled.
    for o in range(cout):
        z = w_ref[o, 0] * xw[0:h, :]
        for c in range(1, cin):
            z = z + w_ref[o, c] * xw[c * h:(c + 1) * h, :]    # (H, 2W)
        up = jnp.dot(uh_ref[...], z,
                     preferred_element_type=jnp.float32)      # (2H, 2W)
        rows = slice(o * h2, (o + 1) * h2)
        o_ref[rows, :] = (up + y_ref[rows, :]).astype(o_ref.dtype)


def _skip_upsample_impl(x, y, conv_w):
    """x: (N, Cin, H, W), y: (N, Cout, 2H, 2W), conv_w: (Cout, Cin) -> (N, Cout, 2H, 2W)."""
    n, cin, h, w = x.shape
    ny, cout, h2, w2 = y.shape
    assert ny == n and h2 == 2 * h and w2 == 2 * w and conv_w.shape == (cout, cin)

    # Separable upsample operators: tiny, cached per size, baked as constants
    # under jit (no per-call host work, no per-call H2D transfer).
    uh = jnp.asarray(_bilinear_up2_matrix(h))                 # (2H, H)
    uwt = jnp.asarray(_bilinear_up2_matrix(w).T)              # (W, 2W)

    # Contiguous (free) NCHW reshapes: fold channels into the sublane axis.
    x_r = x.reshape(n, cin * h, w)
    y_r = y.reshape(n, cout * h2, w2)

    out = pl.pallas_call(
        _skip_upsample_kernel,
        out_shape=jax.ShapeDtypeStruct((n, cout * h2, w2), x.dtype),
        grid=(n,),
        in_specs=[
            pl.BlockSpec(memory_space=pltpu.MemorySpace.SMEM),           # conv_w
            pl.BlockSpec((h2, h), lambda i: (0, 0)),                     # uh   (grid-invariant)
            pl.BlockSpec((w, w2), lambda i: (0, 0)),                     # uw^T (grid-invariant)
            pl.BlockSpec((None, cin * h, w), lambda i: (i, 0, 0)),       # x  (per-batch block)
            pl.BlockSpec((None, cout * h2, w2), lambda i: (i, 0, 0)),    # y  (per-batch block)
        ],
        out_specs=pl.BlockSpec((None, cout * h2, w2), lambda i: (i, 0, 0)),
        compiler_params=pltpu.CompilerParams(
            dimension_semantics=("parallel",)),   # batch axis -> both TCs on v7x
    )(conv_w, uh, uwt, x_r, y_r)

    return out.reshape(n, cout, h2, w2)


# jit so the numpy-built operators become baked constants and the whole thing
# (free reshapes + kernel) compiles once per shape.
skip_upsample = jax.jit(_skip_upsample_impl)


def _reference(x, y, conv_w):
    """Pure-JAX reference following the module's op order (upsample -> conv -> add)."""
    n, cin, h, w = x.shape
    uh = jnp.asarray(_bilinear_up2_matrix(h))
    uw = jnp.asarray(_bilinear_up2_matrix(w))
    up_x = jnp.einsum('ph,nchw,qw->ncpq', uh, x, uw)          # bilinear 2x upsample
    z = jnp.einsum('oc,ncpq->nopq', conv_w, up_x)             # 1x1 conv, no bias
    return z + y


if __name__ == "__main__":
    # Module config: SkipUpSample(in_channels=4, s_factor=4)
    in_channels, s_factor = 4, 4
    N, H, W = 2, 16, 16
    cin = in_channels + s_factor        # conv input channels  (x channels)
    cout = in_channels                  # conv output channels (y channels)

    key = jax.random.PRNGKey(0)
    kx, ky, kw = jax.random.split(key, 3)
    x = jax.random.normal(kx, (N, cin, H, W), dtype=jnp.float32)
    y = jax.random.normal(ky, (N, cout, 2 * H, 2 * W), dtype=jnp.float32)
    # Deterministic 1x1 conv weight (Cout, Cin), bias=False as in the module.
    conv_w = jax.random.normal(kw, (cout, cin), dtype=jnp.float32) * 0.1

    out = skip_upsample(x, y, conv_w)
    jax.block_until_ready(out)
    assert out.shape == (N, cout, 2 * H, 2 * W)

    ref = _reference(x, y, conv_w)
    assert jnp.allclose(out, ref, rtol=1e-4, atol=1e-4), "mismatch vs reference"
    print("KERNEL_OK")
</pallas_src>

<mosaic_0001>
module attributes {stable_mosaic.version = 11 : i64} {
  func.func @_skip_upsample_kernel(%arg0: i32, %arg1: memref<4x8xf32, #tpu.memory_space<smem>>, %arg2: memref<32x16xf32, #tpu.memory_space<vmem>>, %arg3: memref<16x32xf32, #tpu.memory_space<vmem>>, %arg4: memref<1x128x16xf32, #tpu.memory_space<vmem>>, %arg5: memref<1x128x32xf32, #tpu.memory_space<vmem>>, %arg6: memref<1x128x32xf32, #tpu.memory_space<vmem>>) attributes {dimension_semantics = [#tpu.dimension_semantics<parallel>], iteration_bounds = array<i64: 2>, scalar_prefetch = 0 : i64, scratch_operands = 0 : i64, tpu.core_type = #tpu.core_type<tc>, window_params = [{transform_indices = @transform_0, window_bounds = array<i64: 4, 8>}, {pipeline_mode = #tpu.pipeline_mode<synchronous>, transform_indices = @transform_1, window_bounds = array<i64: 32, 16>}, {pipeline_mode = #tpu.pipeline_mode<synchronous>, transform_indices = @transform_2, window_bounds = array<i64: 16, 32>}, {transform_indices = @transform_3, window_bounds = array<i64: 1, 128, 16>}, {transform_indices = @transform_4, window_bounds = array<i64: 1, 128, 32>}, {transform_indices = @transform_5, window_bounds = array<i64: 1, 128, 32>}]} {
    %c0 = arith.constant 0 : index
    %c0_0 = arith.constant 0 : index
    %c0_1 = arith.constant 0 : index
    %0 = vector.load %arg4[%c0, %c0_0, %c0_1] : memref<1x128x16xf32, #tpu.memory_space<vmem>>, vector<1x128x16xf32>
    %1 = vector.shape_cast %0 : vector<1x128x16xf32> to vector<128x16xf32>
    %c0_2 = arith.constant 0 : index
    %c0_3 = arith.constant 0 : index
    %2 = vector.load %arg3[%c0_2, %c0_3] : memref<16x32xf32, #tpu.memory_space<vmem>>, vector<16x32xf32>
    %cst = arith.constant dense<0.000000e+00> : vector<128x32xf32>
    %3 = tpu.matmul %1, %2, %cst {dimension_numbers = #tpu.dot_dimension_numbers<[1], [0], [0], [1], [0, 0, 1, 1], [], []>} : vector<128x16xf32>, vector<16x32xf32>, vector<128x32xf32> -> vector<128x32xf32>
    %c0_4 = arith.constant 0 : index
    %c0_5 = arith.constant 0 : index
    %4 = memref.load %arg1[%c0_4, %c0_5] : memref<4x8xf32, #tpu.memory_space<smem>>
    %5 = vector.extract_strided_slice %3 {offsets = [0, 0], sizes = [16, 32], strides = [1, 1]} : vector<128x32xf32> to vector<16x32xf32>
    %6 = vector.broadcast %4 : f32 to vector<16x32xf32>
    %7 = arith.mulf %6, %5 : vector<16x32xf32>
    %c0_6 = arith.constant 0 : index
    %c1 = arith.constant 1 : index
    %8 = memref.load %arg1[%c0_6, %c1] : memref<4x8xf32, #tpu.memory_space<smem>>
    %9 = vector.extract_strided_slice %3 {offsets = [16, 0], sizes = [16, 32], strides = [1, 1]} : vector<128x32xf32> to vector<16x32xf32>
    %10 = vector.broadcast %8 : f32 to vector<16x32xf32>
    %11 = arith.mulf %10, %9 : vector<16x32xf32>
    %12 = arith.addf %7, %11 : vector<16x32xf32>
    %c0_7 = arith.constant 0 : index
    %c2 = arith.constant 2 : index
    %13 = memref.load %arg1[%c0_7, %c2] : memref<4x8xf32, #tpu.memory_space<smem>>
    %14 = vector.extract_strided_slice %3 {offsets = [32, 0], sizes = [16, 32], strides = [1, 1]} : vector<128x32xf32> to vector<16x32xf32>
    %15 = vector.broadcast %13 : f32 to vector<16x32xf32>
    %16 = arith.mulf %15, %14 : vector<16x32xf32>
    %17 = arith.addf %12, %16 : vector<16x32xf32>
    %c0_8 = arith.constant 0 : index
    %c3 = arith.constant 3 : index
    %18 = memref.load %arg1[%c0_8, %c3] : memref<4x8xf32, #tpu.memory_space<smem>>
    %19 = vector.extract_strided_slice %3 {offsets = [48, 0], sizes = [16, 32], strides = [1, 1]} : vector<128x32xf32> to vector<16x32xf32>
    %20 = vector.broadcast %18 : f32 to vector<16x32xf32>
    %21 = arith.mulf %20, %19 : vector<16x32xf32>
    %22 = arith.addf %17, %21 : vector<16x32xf32>
    %c0_9 = arith.constant 0 : index
    %c4 = arith.constant 4 : index
    %23 = memref.load %arg1[%c0_9, %c4] : memref<4x8xf32, #tpu.memory_space<smem>>
    %24 = vector.extract_strided_slice %3 {offsets = [64, 0], sizes = [16, 32], strides = [1, 1]} : vector<128x32xf32> to vector<16x32xf32>
    %25 = vector.broadcast %23 : f32 to vector<16x32xf32>
    %26 = arith.mulf %25, %24 : vector<16x32xf32>
    %27 = arith.addf %22, %26 : vector<16x32xf32>
    %c0_10 = arith.constant 0 : index
    %c5 = arith.constant 5 : index
    %28 = memref.load %arg1[%c0_10, %c5] : memref<4x8xf32, #tpu.memory_space<smem>>
    %29 = vector.extract_strided_slice %3 {offsets = [80, 0], sizes = [16, 32], strides = [1, 1]} : vector<128x32xf32> to vector<16x32xf32>
    %30 = vector.broadcast %28 : f32 to vector<16x32xf32>
    %31 = arith.mulf %30, %29 : vector<16x32xf32>
    %32 = arith.addf %27, %31 : vector<16x32xf32>
    %c0_11 = arith.constant 0 : index
    %c6 = arith.constant 6 : index
    %33 = memref.load %arg1[%c0_11, %c6] : memref<4x8xf32, #tpu.memory_space<smem>>
    %34 = vector.extract_strided_slice %3 {offsets = [96, 0], sizes = [16, 32], strides = [1, 1]} : vector<128x32xf32> to vector<16x32xf32>
    %35 = vector.broadcast %33 : f32 to vector<16x32xf32>
    %36 = arith.mulf %35, %34 : vector<16x32xf32>
    %37 = arith.addf %32, %36 : vector<16x32xf32>
    %c0_12 = arith.constant 0 : index
    %c7 = arith.constant 7 : index
    %38 = memref.load %arg1[%c0_12, %c7] : memref<4x8xf32, #tpu.memory_space<smem>>
    %39 = vector.extract_strided_slice %3 {offsets = [112, 0], sizes = [16, 32], strides = [1, 1]} : vector<128x32xf32> to vector<16x32xf32>
    %40 = vector.broadcast %38 : f32 to vector<16x32xf32>
    %41 = arith.mulf %40, %39 : vector<16x32xf32>
    %42 = arith.addf %37, %41 : vector<16x32xf32>
    %c0_13 = arith.constant 0 : index
    %c0_14 = arith.constant 0 : index
    %43 = vector.load %arg2[%c0_13, %c0_14] : memref<32x16xf32, #tpu.memory_space<vmem>>, vector<32x16xf32>
    %cst_15 = arith.constant dense<0.000000e+00> : vector<32x32xf32>
    %44 = tpu.matmul %43, %42, %cst_15 {dimension_numbers = #tpu.dot_dimension_numbers<[1], [0], [0], [1], [0, 0, 1, 1], [], []>} : vector<32x16xf32>, vector<16x32xf32>, vector<32x32xf32> -> vector<32x32xf32>
    %c0_16 = arith.constant 0 : index
    %c0_17 = arith.constant 0 : index
    %c0_18 = arith.constant 0 : index
    %45 = vector.load %arg5[%c0_16, %c0_17, %c0_18] : memref<1x128x32xf32, #tpu.memory_space<vmem>>, vector<1x32x32xf32>
    %46 = vector.shape_cast %45 : vector<1x32x32xf32> to vector<32x32xf32>
    %47 = arith.addf %44, %46 : vector<32x32xf32>
    %c0_19 = arith.constant 0 : index
    %c0_20 = arith.constant 0 : index
    %c0_21 = arith.constant 0 : index
    %48 = vector.load %arg6[%c0_19, %c0_20, %c0_21] : memref<1x128x32xf32, #tpu.memory_space<vmem>>, vector<1x32x32xf32>
    %49 = vector.shape_cast %48 : vector<1x32x32xf32> to vector<32x32xf32>
    %50 = vector.shape_cast %47 : vector<32x32xf32> to vector<1x32x32xf32>
    tpu.vector_store %arg6[%c0_19, %c0_20, %c0_21], %50 {strides = array<i32>} : memref<1x128x32xf32, #tpu.memory_space<vmem>>, vector<1x32x32xf32>,
    %c1_22 = arith.constant 1 : index
    %c0_23 = arith.constant 0 : index
    %51 = memref.load %arg1[%c1_22, %c0_23] : memref<4x8xf32, #tpu.memory_space<smem>>
    %52 = vector.extract_strided_slice %3 {offsets = [0, 0], sizes = [16, 32], strides = [1, 1]} : vector<128x32xf32> to vector<16x32xf32>
    %53 = vector.broadcast %51 : f32 to vector<16x32xf32>
    %54 = arith.mulf %53, %52 : vector<16x32xf32>
    %c1_24 = arith.constant 1 : index
    %c1_25 = arith.constant 1 : index
    %55 = memref.load %arg1[%c1_24, %c1_25] : memref<4x8xf32, #tpu.memory_space<smem>>
    %56 = vector.extract_strided_slice %3 {offsets = [16, 0], sizes = [16, 32], strides = [1, 1]} : vector<128x32xf32> to vector<16x32xf32>
    %57 = vector.broadcast %55 : f32 to vector<16x32xf32>
    %58 = arith.mulf %57, %56 : vector<16x32xf32>
    %59 = arith.addf %54, %58 : vector<16x32xf32>
    %c1_26 = arith.constant 1 : index
    %c2_27 = arith.constant 2 : index
    %60 = memref.load %arg1[%c1_26, %c2_27] : memref<4x8xf32, #tpu.memory_space<smem>>
    %61 = vector.extract_strided_slice %3 {offsets = [32, 0], sizes = [16, 32], strides = [1, 1]} : vector<128x32xf32> to vector<16x32xf32>
    %62 = vector.broadcast %60 : f32 to vector<16x32xf32>
    %63 = arith.mulf %62, %61 : vector<16x32xf32>
    %64 = arith.addf %59, %63 : vector<16x32xf32>
    %c1_28 = arith.constant 1 : index
    %c3_29 = arith.constant 3 : index
    %65 = memref.load %arg1[%c1_28, %c3_29] : memref<4x8xf32, #tpu.memory_space<smem>>
    %66 = vector.extract_strided_slice %3 {offsets = [48, 0], sizes = [16, 32], strides = [1, 1]} : vector<128x32xf32> to vector<16x32xf32>
    %67 = vector.broadcast %65 : f32 to vector<16x32xf32>
    %68 = arith.mulf %67, %66 : vector<16x32xf32>
    %69 = arith.addf %64, %68 : vector<16x32xf32>
    %c1_30 = arith.constant 1 : index
    %c4_31 = arith.constant 4 : index
    %70 = memref.load %arg1[%c1_30, %c4_31] : memref<4x8xf32, #tpu.memory_space<smem>>
    %71 = vector.extract_strided_slice %3 {offsets = [64, 0], sizes = [16, 32], strides = [1, 1]} : vector<128x32xf32> to vector<16x32xf32>
    %72 = vector.broadcast %70 : f32 to vector<16x32xf32>
    %73 = arith.mulf %72, %71 : vector<16x32xf32>
    %74 = arith.addf %69, %73 : vector<16x32xf32>
    %c1_32 = arith.constant 1 : index
    %c5_33 = arith.constant 5 : index
    %75 = memref.load %arg1[%c1_32, %c5_33] : memref<4x8xf32, #tpu.memory_space<smem>>
    %76 = vector.extract_strided_slice %3 {offsets = [80, 0], sizes = [16, 32], strides = [1, 1]} : vector<128x32xf32> to vector<16x32xf32>
    %77 = vector.broadcast %75 : f32 to vector<16x32xf32>
    %78 = arith.mulf %77, %76 : vector<16x32xf32>
    %79 = arith.addf %74, %78 : vector<16x32xf32>
    %c1_34 = arith.constant 1 : index
    %c6_35 = arith.constant 6 : index
    %80 = memref.load %arg1[%c1_34, %c6_35] : memref<4x8xf32, #tpu.memory_space<smem>>
    %81 = vector.extract_strided_slice %3 {offsets = [96, 0], sizes = [16, 32], strides = [1, 1]} : vector<128x32xf32> to vector<16x32xf32>
    %82 = vector.broadcast %80 : f32 to vector<16x32xf32>
    %83 = arith.mulf %82, %81 : vector<16x32xf32>
    %84 = arith.addf %79, %83 : vector<16x32xf32>
    %c1_36 = arith.constant 1 : index
    %c7_37 = arith.constant 7 : index
    %85 = memref.load %arg1[%c1_36, %c7_37] : memref<4x8xf32, #tpu.memory_space<smem>>
    %86 = vector.extract_strided_slice %3 {offsets = [112, 0], sizes = [16, 32], strides = [1, 1]} : vector<128x32xf32> to vector<16x32xf32>
    %87 = vector.broadcast %85 : f32 to vector<16x32xf32>
    %88 = arith.mulf %87, %86 : vector<16x32xf32>
    %89 = arith.addf %84, %88 : vector<16x32xf32>
    %c0_38 = arith.constant 0 : index
    %c0_39 = arith.constant 0 : index
    %90 = vector.load %arg2[%c0_38, %c0_39] : memref<32x16xf32, #tpu.memory_space<vmem>>, vector<32x16xf32>
    %cst_40 = arith.constant dense<0.000000e+00> : vector<32x32xf32>
    %91 = tpu.matmul %90, %89, %cst_40 {dimension_numbers = #tpu.dot_dimension_numbers<[1], [0], [0], [1], [0, 0, 1, 1], [], []>} : vector<32x16xf32>, vector<16x32xf32>, vector<32x32xf32> -> vector<32x32xf32>
    %c0_41 = arith.constant 0 : index
    %c32 = arith.constant 32 : index
    %c0_42 = arith.constant 0 : index
    %92 = vector.load %arg5[%c0_41, %c32, %c0_42] : memref<1x128x32xf32, #tpu.memory_space<vmem>>, vector<1x32x32xf32>
    %93 = vector.shape_cast %92 : vector<1x32x32xf32> to vector<32x32xf32>
    %94 = arith.addf %91, %93 : vector<32x32xf32>
    %c0_43 = arith.constant 0 : index
    %c32_44 = arith.constant 32 : index
    %c0_45 = arith.constant 0 : index
    %95 = vector.load %arg6[%c0_43, %c32_44, %c0_45] : memref<1x128x32xf32, #tpu.memory_space<vmem>>, vector<1x32x32xf32>
    %96 = vector.shape_cast %95 : vector<1x32x32xf32> to vector<32x32xf32>
    %97 = vector.shape_cast %94 : vector<32x32xf32> to vector<1x32x32xf32>
    tpu.vector_store %arg6[%c0_43, %c32_44, %c0_45], %97 {strides = array<i32>} : memref<1x128x32xf32, #tpu.memory_space<vmem>>, vector<1x32x32xf32>,
    %c2_46 = arith.constant 2 : index
    %c0_47 = arith.constant 0 : index
    %98 = memref.load %arg1[%c2_46, %c0_47] : memref<4x8xf32, #tpu.memory_space<smem>>
    %99 = vector.extract_strided_slice %3 {offsets = [0, 0], sizes = [16, 32], strides = [1, 1]} : vector<128x32xf32> to vector<16x32xf32>
    %100 = vector.broadcast %98 : f32 to vector<16x32xf32>
    %101 = arith.mulf %100, %99 : vector<16x32xf32>
    %c2_48 = arith.constant 2 : index
    %c1_49 = arith.constant 1 : index
    %102 = memref.load %arg1[%c2_48, %c1_49] : memref<4x8xf32, #tpu.memory_space<smem>>
    %103 = vector.extract_strided_slice %3 {offsets = [16, 0], sizes = [16, 32], strides = [1, 1]} : vector<128x32xf32> to vector<16x32xf32>
    %104 = vector.broadcast %102 : f32 to vector<16x32xf32>
    %105 = arith.mulf %104, %103 : vector<16x32xf32>
    %106 = arith.addf %101, %105 : vector<16x32xf32>
    %c2_50 = arith.constant 2 : index
    %c2_51 = arith.constant 2 : index
    %107 = memref.load %arg1[%c2_50, %c2_51] : memref<4x8xf32, #tpu.memory_space<smem>>
    %108 = vector.extract_strided_slice %3 {offsets = [32, 0], sizes = [16, 32], strides = [1, 1]} : vector<128x32xf32> to vector<16x32xf32>
    %109 = vector.broadcast %107 : f32 to vector<16x32xf32>
    %110 = arith.mulf %109, %108 : vector<16x32xf32>
    %111 = arith.addf %106, %110 : vector<16x32xf32>
    %c2_52 = arith.constant 2 : index
    %c3_53 = arith.constant 3 : index
    %112 = memref.load %arg1[%c2_52, %c3_53] : memref<4x8xf32, #tpu.memory_space<smem>>
    %113 = vector.extract_strided_slice %3 {offsets = [48, 0], sizes = [16, 32], strides = [1, 1]} : vector<128x32xf32> to vector<16x32xf32>
    %114 = vector.broadcast %112 : f32 to vector<16x32xf32>
    %115 = arith.mulf %114, %113 : vector<16x32xf32>
    %116 = arith.addf %111, %115 : vector<16x32xf32>
    %c2_54 = arith.constant 2 : index
    %c4_55 = arith.constant 4 : index
    %117 = memref.load %arg1[%c2_54, %c4_55] : memref<4x8xf32, #tpu.memory_space<smem>>
    %118 = vector.extract_strided_slice %3 {offsets = [64, 0], sizes = [16, 32], strides = [1, 1]} : vector<128x32xf32> to vector<16x32xf32>
    %119 = vector.broadcast %117 : f32 to vector<16x32xf32>
    %120 = arith.mulf %119, %118 : vector<16x32xf32>
    %121 = arith.addf %116, %120 : vector<16x32xf32>
    %c2_56 = arith.constant 2 : index
    %c5_57 = arith.constant 5 : index
    %122 = memref.load %arg1[%c2_56, %c5_57] : memref<4x8xf32, #tpu.memory_space<smem>>
    %123 = vector.extract_strided_slice %3 {offsets = [80, 0], sizes = [16, 32], strides = [1, 1]} : vector<128x32xf32> to vector<16x32xf32>
    %124 = vector.broadcast %122 : f32 to vector<16x32xf32>
    %125 = arith.mulf %124, %123 : vector<16x32xf32>
    %126 = arith.addf %121, %125 : vector<16x32xf32>
    %c2_58 = arith.constant 2 : index
    %c6_59 = arith.constant 6 : index
    %127 = memref.load %arg1[%c2_58, %c6_59] : memref<4x8xf32, #tpu.memory_space<smem>>
    %128 = vector.extract_strided_slice %3 {offsets = [96, 0], sizes = [16, 32], strides = [1, 1]} : vector<128x32xf32> to vector<16x32xf32>
    %129 = vector.broadcast %127 : f32 to vector<16x32xf32>
    %130 = arith.mulf %129, %128 : vector<16x32xf32>
    %131 = arith.addf %126, %130 : vector<16x32xf32>
    %c2_60 = arith.constant 2 : index
    %c7_61 = arith.constant 7 : index
    %132 = memref.load %arg1[%c2_60, %c7_61] : memref<4x8xf32, #tpu.memory_space<smem>>
    %133 = vector.extract_strided_slice %3 {offsets = [112, 0], sizes = [16, 32], strides = [1, 1]} : vector<128x32xf32> to vector<16x32xf32>
    %134 = vector.broadcast %132 : f32 to vector<16x32xf32>
    %135 = arith.mulf %134, %133 : vector<16x32xf32>
    %136 = arith.addf %131, %135 : vector<16x32xf32>
    %c0_62 = arith.constant 0 : index
    %c0_63 = arith.constant 0 : index
    %137 = vector.load %arg2[%c0_62, %c0_63] : memref<32x16xf32, #tpu.memory_space<vmem>>, vector<32x16xf32>
    %cst_64 = arith.constant dense<0.000000e+00> : vector<32x32xf32>
    %138 = tpu.matmul %137, %136, %cst_64 {dimension_numbers = #tpu.dot_dimension_numbers<[1], [0], [0], [1], [0, 0, 1, 1], [], []>} : vector<32x16xf32>, vector<16x32xf32>, vector<32x32xf32> -> vector<32x32xf32>
    %c0_65 = arith.constant 0 : index
    %c64 = arith.constant 64 : index
    %c0_66 = arith.constant 0 : index
    %139 = vector.load %arg5[%c0_65, %c64, %c0_66] : memref<1x128x32xf32, #tpu.memory_space<vmem>>, vector<1x32x32xf32>
    %140 = vector.shape_cast %139 : vector<1x32x32xf32> to vector<32x32xf32>
    %141 = arith.addf %138, %140 : vector<32x32xf32>
    %c0_67 = arith.constant 0 : index
    %c64_68 = arith.constant 64 : index
    %c0_69 = arith.constant 0 : index
    %142 = vector.load %arg6[%c0_67, %c64_68, %c0_69] : memref<1x128x32xf32, #tpu.memory_space<vmem>>, vector<1x32x32xf32>
    %143 = vector.shape_cast %142 : vector<1x32x32xf32> to vector<32x32xf32>
    %144 = vector.shape_cast %141 : vector<32x32xf32> to vector<1x32x32xf32>
    tpu.vector_store %arg6[%c0_67, %c64_68, %c0_69], %144 {strides = array<i32>} : memref<1x128x32xf32, #tpu.memory_space<vmem>>, vector<1x32x32xf32>,
    %c3_70 = arith.constant 3 : index
    %c0_71 = arith.constant 0 : index
    %145 = memref.load %arg1[%c3_70, %c0_71] : memref<4x8xf32, #tpu.memory_space<smem>>
    %146 = vector.extract_strided_slice %3 {offsets = [0, 0], sizes = [16, 32], strides = [1, 1]} : vector<128x32xf32> to vector<16x32xf32>
    %147 = vector.broadcast %145 : f32 to vector<16x32xf32>
    %148 = arith.mulf %147, %146 : vector<16x32xf32>
    %c3_72 = arith.constant 3 : index
    %c1_73 = arith.constant 1 : index
    %149 = memref.load %arg1[%c3_72, %c1_73] : memref<4x8xf32, #tpu.memory_space<smem>>
    %150 = vector.extract_strided_slice %3 {offsets = [16, 0], sizes = [16, 32], strides = [1, 1]} : vector<128x32xf32> to vector<16x32xf32>
    %151 = vector.broadcast %149 : f32 to vector<16x32xf32>
    %152 = arith.mulf %151, %150 : vector<16x32xf32>
    %153 = arith.addf %148, %152 : vector<16x32xf32>
    %c3_74 = arith.constant 3 : index
    %c2_75 = arith.constant 2 : index
    %154 = memref.load %arg1[%c3_74, %c2_75] : memref<4x8xf32, #tpu.memory_space<smem>>
    %155 = vector.extract_strided_slice %3 {offsets = [32, 0], sizes = [16, 32], strides = [1, 1]} : vector<128x32xf32> to vector<16x32xf32>
    %156 = vector.broadcast %154 : f32 to vector<16x32xf32>
    %157 = arith.mulf %156, %155 : vector<16x32xf32>
    %158 = arith.addf %153, %157 : vector<16x32xf32>
    %c3_76 = arith.constant 3 : index
    %c3_77 = arith.constant 3 : index
    %159 = memref.load %arg1[%c3_76, %c3_77] : memref<4x8xf32, #tpu.memory_space<smem>>
    %160 = vector.extract_strided_slice %3 {offsets = [48, 0], sizes = [16, 32], strides = [1, 1]} : vector<128x32xf32> to vector<16x32xf32>
    %161 = vector.broadcast %159 : f32 to vector<16x32xf32>
    %162 = arith.mulf %161, %160 : vector<16x32xf32>
    %163 = arith.addf %158, %162 : vector<16x32xf32>
    %c3_78 = arith.constant 3 : index
    %c4_79 = arith.constant 4 : index
    %164 = memref.load %arg1[%c3_78, %c4_79] : memref<4x8xf32, #tpu.memory_space<smem>>
    %165 = vector.extract_strided_slice %3 {offsets = [64, 0], sizes = [16, 32], strides = [1, 1]} : vector<128x32xf32> to vector<16x32xf32>
    %166 = vector.broadcast %164 : f32 to vector<16x32xf32>
    %167 = arith.mulf %166, %165 : vector<16x32xf32>
    %168 = arith.addf %163, %167 : vector<16x32xf32>
    %c3_80 = arith.constant 3 : index
    %c5_81 = arith.constant 5 : index
    %169 = memref.load %arg1[%c3_80, %c5_81] : memref<4x8xf32, #tpu.memory_space<smem>>
    %170 = vector.extract_strided_slice %3 {offsets = [80, 0], sizes = [16, 32], strides = [1, 1]} : vector<128x32xf32> to vector<16x32xf32>
    %171 = vector.broadcast %169 : f32 to vector<16x32xf32>
    %172 = arith.mulf %171, %170 : vector<16x32xf32>
    %173 = arith.addf %168, %172 : vector<16x32xf32>
    %c3_82 = arith.constant 3 : index
    %c6_83 = arith.constant 6 : index
    %174 = memref.load %arg1[%c3_82, %c6_83] : memref<4x8xf32, #tpu.memory_space<smem>>
    %175 = vector.extract_strided_slice %3 {offsets = [96, 0], sizes = [16, 32], strides = [1, 1]} : vector<128x32xf32> to vector<16x32xf32>
    %176 = vector.broadcast %174 : f32 to vector<16x32xf32>
    %177 = arith.mulf %176, %175 : vector<16x32xf32>
    %178 = arith.addf %173, %177 : vector<16x32xf32>
    %c3_84 = arith.constant 3 : index
    %c7_85 = arith.constant 7 : index
    %179 = memref.load %arg1[%c3_84, %c7_85] : memref<4x8xf32, #tpu.memory_space<smem>>
    %180 = vector.extract_strided_slice %3 {offsets = [112, 0], sizes = [16, 32], strides = [1, 1]} : vector<128x32xf32> to vector<16x32xf32>
    %181 = vector.broadcast %179 : f32 to vector<16x32xf32>
    %182 = arith.mulf %181, %180 : vector<16x32xf32>
    %183 = arith.addf %178, %182 : vector<16x32xf32>
    %c0_86 = arith.constant 0 : index
    %c0_87 = arith.constant 0 : index
    %184 = vector.load %arg2[%c0_86, %c0_87] : memref<32x16xf32, #tpu.memory_space<vmem>>, vector<32x16xf32>
    %cst_88 = arith.constant dense<0.000000e+00> : vector<32x32xf32>
    %185 = tpu.matmul %184, %183, %cst_88 {dimension_numbers = #tpu.dot_dimension_numbers<[1], [0], [0], [1], [0, 0, 1, 1], [], []>} : vector<32x16xf32>, vector<16x32xf32>, vector<32x32xf32> -> vector<32x32xf32>
    %c0_89 = arith.constant 0 : index
    %c96 = arith.constant 96 : index
    %c0_90 = arith.constant 0 : index
    %186 = vector.load %arg5[%c0_89, %c96, %c0_90] : memref<1x128x32xf32, #tpu.memory_space<vmem>>, vector<1x32x32xf32>
    %187 = vector.shape_cast %186 : vector<1x32x32xf32> to vector<32x32xf32>
    %188 = arith.addf %185, %187 : vector<32x32xf32>
    %c0_91 = arith.constant 0 : index
    %c96_92 = arith.constant 96 : index
    %c0_93 = arith.constant 0 : index
    %189 = vector.load %arg6[%c0_91, %c96_92, %c0_93] : memref<1x128x32xf32, #tpu.memory_space<vmem>>, vector<1x32x32xf32>
    %190 = vector.shape_cast %189 : vector<1x32x32xf32> to vector<32x32xf32>
    %191 = vector.shape_cast %188 : vector<32x32xf32> to vector<1x32x32xf32>
    tpu.vector_store %arg6[%c0_91, %c96_92, %c0_93], %191 {strides = array<i32>} : memref<1x128x32xf32, #tpu.memory_space<vmem>>, vector<1x32x32xf32>,
    return
  }
  func.func @transform_0(%arg0: i32) -> (i32, i32) {
    %c0_i32 = arith.constant 0 : i32
    %c0_i32_0 = arith.constant 0 : i32
    %c0_i32_1 = arith.constant 0 : i32
    return %c0_i32, %c0_i32_0 : i32, i32
  }
  func.func @transform_1(%arg0: i32) -> (i32, i32) {
    %c0_i32 = arith.constant 0 : i32
    %c0_i32_0 = arith.constant 0 : i32
    %c0_i32_1 = arith.constant 0 : i32
    return %c0_i32, %c0_i32_0 : i32, i32
  }
  func.func @transform_2(%arg0: i32) -> (i32, i32) {
    %c0_i32 = arith.constant 0 : i32
    %c0_i32_0 = arith.constant 0 : i32
    %c0_i32_1 = arith.constant 0 : i32
    return %c0_i32, %c0_i32_0 : i32, i32
  }
  func.func @transform_3(%arg0: i32) -> (i32, i32, i32) {
    %c0_i32 = arith.constant 0 : i32
    %c0_i32_0 = arith.constant 0 : i32
    %c0_i32_1 = arith.constant 0 : i32
    return %arg0, %c0_i32, %c0_i32_0 : i32, i32, i32
  }
  func.func @transform_4(%arg0: i32) -> (i32, i32, i32) {
    %c0_i32 = arith.constant 0 : i32
    %c0_i32_0 = arith.constant 0 : i32
    %c0_i32_1 = arith.constant 0 : i32
    return %arg0, %c0_i32, %c0_i32_0 : i32, i32, i32
  }
  func.func @transform_5(%arg0: i32) -> (i32, i32, i32) {
    %c0_i32 = arith.constant 0 : i32
    %c0_i32_0 = arith.constant 0 : i32
    %c0_i32_1 = arith.constant 0 : i32
    return %arg0, %c0_i32, %c0_i32_0 : i32, i32, i32
  }
}

</mosaic_0001>

<llo_original>
// kernel: _skip_upsample_impl.1
$region0: #{_skip_upsample_impl.1}
  #allocation0 [shape = 'u32[]', space=smem, size = 0x4, offset = 0x4, fixed_abs, tag = 'smem constant byte address 0x4 - core index']
  #allocation1 [shape = 'u32[144,128]{1,0:T(1,128)}', space=vmem, size = 0x12000, scoped, tag = 'internal scratch']
  %s0 = inlined_call_operand.vmem [shape: f32[4,8], index: 0, kind: input, shape index: {}]
  %s1 = inlined_call_operand.hbm [shape: f32[32,16], index: 1, kind: input, shape index: {}]
  %s2 = inlined_call_operand.vmem [shape: f32[16,32], index: 2, kind: input, shape index: {}]
  %s3 = inlined_call_operand.hbm [shape: f32[2,128,16], index: 3, kind: input, shape index: {}]
  %s4 = inlined_call_operand.hbm [shape: f32[2,128,32], index: 4, kind: input, shape index: {}]
  %s5 = inlined_call_operand.hbm [shape: f32[2,128,32], index: 5, kind: output, shape index: {}]
  %s6 = sld [smem:[#allocation0]]
  $region69: #{_skip_upsample_impl.1} parent=0
    _
  %s8 = ssub.s32 1, %s6
  %s9 = scalar_select 0, %s8, %s6
  $region1: #{_skip_upsample_impl.1} parent=0
    #allocation2 [shape = 'u8[2048]{0}', space=smem, size = 0x800, scoped, tag = 'input window, operand 0, single buffered']
    #allocation3 [shape = 's32[2]{0}', space=sflag, size = 0x8, scoped, tag = 'scoped memory for _skip_upsample_impl.1']
    #allocation4 [shape = 's32[2]{0}', space=sflag, size = 0x8, scoped, tag = 'scoped memory for _skip_upsample_impl.1']
    #allocation5 [shape = 's32[2]{0}', space=sflag, size = 0x8, scoped, tag = 'scoped memory for _skip_upsample_impl.1']
    #allocation6 [shape = 'u8[16384]{0}', space=vmem, size = 0x4000, scoped, tag = 'input window, operand 1, single buffered']
    #allocation7 [shape = 'u8[131072]{0}', space=vmem, size = 0x20000, scoped, tag = 'input window, operand 3']
    #allocation8 [shape = 's32[2]{0}', space=sflag, size = 0x8, scoped, tag = 'scoped memory for _skip_upsample_impl.1']
    #allocation9 [shape = 'u8[131072]{0}', space=vmem, size = 0x20000, scoped, tag = 'input window, operand 4']
    #allocation10 [shape = 'u8[131072]{0}', space=vmem, size = 0x20000, scoped, tag = 'output window, operand 0']
    %10 = vsyncpa [#allocation5], 0
    %11 = vsyncpa [#allocation3], 0
    %12 = vsyncpa [#allocation8], 0
    %s13 = scalar_lea.sflag [#allocation8], 1
    %14 = vsyncpa %s13, 0
    %15 = vsyncpa [#allocation4], 0
    %s16 = scalar_lea.sflag [#allocation4], 1
    %17 = vsyncpa %s16, 0
    loop: start=0, step=1, limit=4
    $region2: #{_skip_upsample_impl.1} parent=1 // loop_pre_header
      _
    $region3: #{_skip_upsample_impl.1} parent=1 // loop_header
      %s19 = sphi 0, %s23
      %p20 = scmp.ge.s32.totalorder %s19, 4
      %s27 = sphi 0, %s27
      %s29 = sphi 0, %s27
      %s30 = sphi 0, %s29
      %s44 = sphi 0, %s30
      %s48 = sphi 0, %s48
      %s50 = sphi 0, %s48
      %s51 = sphi 0, %s50
      %s65 = sphi 0, %s51
      %s69 = sphi 0, %s69
      %s71 = sphi 0, %s69
      %s72 = sphi 0, %s71
      %s86 = sphi 0, %s72
      %s92 = sphi 0, %s94
      %s95 = sphi 0, %s92
      %s96 = sphi 0, %s95
      %s112 = sphi 0, %s96
      %s118 = sphi 0, %s120
      %s121 = sphi 0, %s118
      %s122 = sphi 0, %s121
      %s138 = sphi 0, %s122
      %s144 = sphi 0, %s146
      %s147 = sphi 0, %s144
      %s148 = sphi 0, %s147
      %s164 = sphi 0, %s148
    $region4: #{_skip_upsample_impl.1} parent=1 // loop_header_branch
      %22 = sbr.rel (%p20) target = $region8
    $region5: #{_skip_upsample_impl.1} parent=1 // loop_body
      %s24 = ssub.s32 %s19, 1
      %s25 = ssub.s32 %s19, 2
      %s26 = sadd.s32 %s19, 1
      %s28 = sadd.s32 %s27, 1
      %p31 = scmp.eq.s32.totalorder %s19, 1
      %p32 = scmp.ne.s32.totalorder %s27, %s29
      %p33 = scmp.eq.s32.totalorder %s19, 0
      %p34 = por %p32, %p33
      %p35 = scmp.ne.s32.totalorder %s27, %s29
      %p36 = scmp.eq.s32.totalorder %s24, 1
      %p37 = por %p35, %p36
      %p38 = scmp.ne.s32.totalorder %s29, %s30
      %p39 = scmp.eq.s32.totalorder %s24, 0
      %p40 = por %p38, %p39
      %p41 = scmp.ne.s32.totalorder %s29, %s30
      %p42 = scmp.eq.s32.totalorder %s25, 1
      %p43 = por %p41, %p42
      %p45 = scmp.ne.s32.totalorder %s30, %s44
      %p46 = scmp.eq.s32.totalorder %s25, 0
      %p47 = por %p45, %p46
      %s49 = sadd.s32 %s48, 1
      %p52 = scmp.eq.s32.totalorder %s19, 1
      %p53 = scmp.ne.s32.totalorder %s48, %s50
      %p54 = scmp.eq.s32.totalorder %s19, 0
      %p55 = por %p53, %p54
      %p56 = scmp.ne.s32.totalorder %s48, %s50
      %p57 = scmp.eq.s32.totalorder %s24, 1
      %p58 = por %p56, %p57
      %p59 = scmp.ne.s32.totalorder %s50, %s51
      %p60 = scmp.eq.s32.totalorder %s24, 0
      %p61 = por %p59, %p60
      %p62 = scmp.ne.s32.totalorder %s50, %s51
      %p63 = scmp.eq.s32.totalorder %s25, 1
      %p64 = por %p62, %p63
      %p66 = scmp.ne.s32.totalorder %s51, %s65
      %p67 = scmp.eq.s32.totalorder %s25, 0
      %p68 = por %p66, %p67
      %s70 = sadd.s32 %s69, 1
      %p73 = scmp.eq.s32.totalorder %s19, 1
      %p74 = scmp.ne.s32.totalorder %s69, %s71
      %p75 = scmp.eq.s32.totalorder %s19, 0
      %p76 = por %p74, %p75
      %p77 = scmp.ne.s32.totalorder %s69, %s71
      %p78 = scmp.eq.s32.totalorder %s24, 1
      %p79 = por %p77, %p78
      %p80 = scmp.ne.s32.totalorder %s71, %s72
      %p81 = scmp.eq.s32.totalorder %s24, 0
      %p82 = por %p80, %p81
      %p83 = scmp.ne.s32.totalorder %s71, %s72
      %p84 = scmp.eq.s32.totalorder %s25, 1
      %p85 = por %p83, %p84
      %p87 = scmp.ne.s32.totalorder %s72, %s86
      %p88 = scmp.eq.s32.totalorder %s25, 0
      %p89 = por %p87, %p88
      %s90 = ssub.s32 %s19, %s26
      %p91 = scmp.eq.s32.totalorder %s90, 0
      %s93 = sadd.s32 %s92, 1
      %s94 = scalar_select %p91, %s92, %s93
      %p97 = pneg %p91
      %p98 = scmp.eq.s32.totalorder %s19, 1
      %p99 = por %p97, %p98
      %p100 = scmp.ne.s32.totalorder %s92, %s95
      %p101 = scmp.eq.s32.totalorder %s19, 0
      %p102 = por %p100, %p101
      %p103 = scmp.ne.s32.totalorder %s92, %s95
      %p104 = scmp.eq.s32.totalorder %s24, 1
      %p105 = por %p103, %p104
      %p106 = scmp.ne.s32.totalorder %s95, %s96
      %p107 = scmp.eq.s32.totalorder %s24, 0
      %p108 = por %p106, %p107
      %p109 = scmp.ne.s32.totalorder %s95, %s96
      %p110 = scmp.eq.s32.totalorder %s25, 1
      %p111 = por %p109, %p110
      %p113 = scmp.ne.s32.totalorder %s96, %s112
      %p114 = scmp.eq.s32.totalorder %s25, 0
      %p115 = por %p113, %p114
      %s116 = ssub.s32 %s19, %s26
      %p117 = scmp.eq.s32.totalorder %s116, 0
      %s119 = sadd.s32 %s118, 1
      %s120 = scalar_select %p117, %s118, %s119
      %p123 = pneg %p117
      %p124 = scmp.eq.s32.totalorder %s19, 1
      %p125 = por %p123, %p124
      %p126 = scmp.ne.s32.totalorder %s118, %s121
      %p127 = scmp.eq.s32.totalorder %s19, 0
      %p128 = por %p126, %p127
      %p129 = scmp.ne.s32.totalorder %s118, %s121
      %p130 = scmp.eq.s32.totalorder %s24, 1
      %p131 = por %p129, %p130
      %p132 = scmp.ne.s32.totalorder %s121, %s122
      %p133 = scmp.eq.s32.totalorder %s24, 0
      %p134 = por %p132, %p133
      %p135 = scmp.ne.s32.totalorder %s121, %s122
      %p136 = scmp.eq.s32.totalorder %s25, 1
      %p137 = por %p135, %p136
      %p139 = scmp.ne.s32.totalorder %s122, %s138
      %p140 = scmp.eq.s32.totalorder %s25, 0
      %p141 = por %p139, %p140
      %s142 = ssub.s32 %s19, %s26
      %p143 = scmp.eq.s32.totalorder %s142, 0
      %s145 = sadd.s32 %s144, 1
      %s146 = scalar_select %p143, %s144, %s145
      %p149 = pneg %p143
      %p150 = scmp.eq.s32.totalorder %s19, 1
      %p151 = por %p149, %p150
      %p152 = scmp.ne.s32.totalorder %s144, %s147
      %p153 = scmp.eq.s32.totalorder %s19, 0
      %p154 = por %p152, %p153
      %p155 = scmp.ne.s32.totalorder %s144, %s147
      %p156 = scmp.eq.s32.totalorder %s24, 1
      %p157 = por %p155, %p156
      %p158 = scmp.ne.s32.totalorder %s147, %s148
      %p159 = scmp.eq.s32.totalorder %s24, 0
      %p160 = por %p158, %p159
      %p161 = scmp.ne.s32.totalorder %s147, %s148
      %p162 = scmp.eq.s32.totalorder %s25, 1
      %p163 = por %p161, %p162
      %p165 = scmp.ne.s32.totalorder %s148, %s164
      %p166 = scmp.eq.s32.totalorder %s25, 0
      %p167 = por %p165, %p166
      %p168 = scmp.le.s32.totalorder 1, %s19
      %p169 = scmp.lt.s32.totalorder %s19, 3
      %p170 = pnand %p168, %p169
      %p171 = pneg %p170
      // Predicated region
      $region9: #{_skip_upsample_impl.1} parent=5 // pred_check
        _
      $region10: #{_skip_upsample_impl.1} parent=5 // pred_check_branch
        %173 = sbr.rel (%p170) target = $region12
      $region11: #{_skip_upsample_impl.1} parent=5 // pred_region
        %s174 = ssub.s32 %s19, 1
        // Predicated region
        $region13: #{_skip_upsample_impl.1} parent=11 // pred_check
          %p175 = pneg %p40
        $region14: #{_skip_upsample_impl.1} parent=11 // pred_check_branch
          %177 = sbr.rel (%p175) target = $region16
        $region15: #{_skip_upsample_impl.1} parent=11 // pred_region
          %s179 = ssub.s32 64, 64
          %180 = vsyncadd [#allocation5], %s179
          %s182 = sshll.u32 %s0, 4
          %s183 = int_to_ptr.vmem [resolvable:$true] %s182
          %185 = dma.vmem_to_smem %s183, 64, [#allocation2], [#allocation5]
        $region16: #{_skip_upsample_impl.1} parent=11 // pred_fallthru
          _
        // Predicated region
        $region17: #{_skip_upsample_impl.1} parent=11 // pred_check
          %p186 = pneg %p61
        $region18: #{_skip_upsample_impl.1} parent=11 // pred_check_branch
          %188 = sbr.rel (%p186) target = $region20
        $region19: #{_skip_upsample_impl.1} parent=11 // pred_region
          %s190 = ssub.s32 512, 512
          %191 = vsyncadd [#allocation3], %s190
          %s192 = sshll.u32 [#allocation6], 4
          %s193 = int_to_ptr.vmem [resolvable:$true] %s192
          %198 = dma.hbm_to_vmem [thread:$0]  %s1, 512, %s193, [#allocation3], 128, 128, 8
        $region20: #{_skip_upsample_impl.1} parent=11 // pred_fallthru
          _
        // Predicated region
        $region21: #{_skip_upsample_impl.1} parent=11 // pred_check
          %p199 = pneg %p82
        $region22: #{_skip_upsample_impl.1} parent=11 // pred_check_branch
          %201 = sbr.rel (%p199) target = $region24
        $region23: #{_skip_upsample_impl.1} parent=11 // pred_region
          _
        $region24: #{_skip_upsample_impl.1} parent=11 // pred_fallthru
          _
      $region12: #{_skip_upsample_impl.1} parent=5 // pred_fallthru
        _
      %p202 = scmp.lt.s32.totalorder %s19, 2
      // Predicated region
      $region25: #{_skip_upsample_impl.1} parent=5 // pred_check
        %p203 = pneg %p202
      $region26: #{_skip_upsample_impl.1} parent=5 // pred_check_branch
        %205 = sbr.rel (%p203) target = $region28
      $region27: #{_skip_upsample_impl.1} parent=5 // pred_region
        // Predicated region
        $region29: #{_skip_upsample_impl.1} parent=27 // pred_check
          %p206 = pneg %p102
        $region30: #{_skip_upsample_impl.1} parent=27 // pred_check_branch
          %208 = sbr.rel (%p206) target = $region32
        $region31: #{_skip_upsample_impl.1} parent=27 // pred_region
          %s209 = sand.u32 %s19, 1
          %s210 = scalar_lea.sflag [#allocation8], %s209
          %s211 = sand.u32 %s92, 1
          %s212 = smul.addr %s211, 128
          %s213 = scalar_lea.vmem [#allocation7], %s212
          %s215 = ssub.s32 2048, 2048
          %216 = vsyncadd %s210, %s215
          %s217 = smul.addr %s19, 16
          %s218 = smul.addr %s217, 128
          %s219 = scalar_lea.hbm %s3, %s218
          %s220 = sshll.u32 %s213, 4
          %s221 = int_to_ptr.vmem [resolvable:$true] %s220
          %226 = dma.hbm_to_vmem [thread:$0]  %s219, 2048, %s221, %s210, 128, 128, 8
        $region32: #{_skip_upsample_impl.1} parent=27 // pred_fallthru
          _
        // Predicated region
        $region33: #{_skip_upsample_impl.1} parent=27 // pred_check
          %p227 = pneg %p128
        $region34: #{_skip_upsample_impl.1} parent=27 // pred_check_branch
          %229 = sbr.rel (%p227) target = $region36
        $region35: #{_skip_upsample_impl.1} parent=27 // pred_region
          %s230 = sand.u32 %s19, 1
          %s231 = scalar_lea.sflag [#allocation8], %s230
          %s232 = sand.u32 %s118, 1
          %s233 = smul.addr %s232, 128
          %s234 = scalar_lea.vmem [#allocation9], %s233
          %s236 = ssub.s32 2048, 2048
          %237 = vsyncadd %s231, %s236
          %s238 = smul.addr %s19, 16
          %s239 = smul.addr %s238, 128
          %s240 = scalar_lea.hbm %s4, %s239
          %s241 = sshll.u32 %s234, 4
          %s242 = int_to_ptr.vmem [resolvable:$true] %s241
          %247 = dma.hbm_to_vmem [thread:$0]  %s240, 2048, %s242, %s231, 128, 128, 8
        $region36: #{_skip_upsample_impl.1} parent=27 // pred_fallthru
          _
      $region28: #{_skip_upsample_impl.1} parent=5 // pred_fallthru
        _
      %p248 = scmp.le.s32.totalorder 1, %s19
      %p249 = scmp.lt.s32.totalorder %s19, 3
      %p250 = pnand %p248, %p249
      %p251 = pneg %p250
      // Predicated region
      $region37: #{_skip_upsample_impl.1} parent=5 // pred_check
        _
      $region38: #{_skip_upsample_impl.1} parent=5 // pred_check_branch
        %253 = sbr.rel (%p250) target = $region40
      $region39: #{_skip_upsample_impl.1} parent=5 // pred_region
        %s254 = ssub.s32 %s19, 1
        // Predicated region
        $region41: #{_skip_upsample_impl.1} parent=39 // pred_check
          %p255 = pneg %p40
        $region42: #{_skip_upsample_impl.1} parent=39 // pred_check_branch
          %257 = sbr.rel (%p255) target = $region44
        $region43: #{_skip_upsample_impl.1} parent=39 // pred_region
          %258 = dma.done [#allocation5], 64
        $region44: #{_skip_upsample_impl.1} parent=39 // pred_fallthru
          _
        // Predicated region
        $region45: #{_skip_upsample_impl.1} parent=39 // pred_check
          %p259 = pneg %p61
        $region46: #{_skip_upsample_impl.1} parent=39 // pred_check_branch
          %261 = sbr.rel (%p259) target = $region48
        $region47: #{_skip_upsample_impl.1} parent=39 // pred_region
          %262 = dma.done [#allocation3], 512
        $region48: #{_skip_upsample_impl.1} parent=39 // pred_fallthru
          _
        %s263 = sand.u32 %s24, 1
        %s264 = scalar_lea.sflag [#allocation8], %s263
        %s265 = sand.u32 %s95, 1
        %s266 = smul.addr %s265, 128
        %s267 = scalar_lea.vmem [#allocation7], %s266
        // Predicated region
        $region49: #{_skip_upsample_impl.1} parent=39 // pred_check
          %p268 = pneg %p108
        $region50: #{_skip_upsample_impl.1} parent=39 // pred_check_branch
          %270 = sbr.rel (%p268) target = $region52
        $region51: #{_skip_upsample_impl.1} parent=39 // pred_region
          %271 = dma.done %s264, 2048
        $region52: #{_skip_upsample_impl.1} parent=39 // pred_fallthru
          _
        %s272 = sand.u32 %s24, 1
        %s273 = scalar_lea.sflag [#allocation8], %s272
        %s274 = sand.u32 %s121, 1
        %s275 = smul.addr %s274, 128
        %s276 = scalar_lea.vmem [#allocation9], %s275
        // Predicated region
        $region53: #{_skip_upsample_impl.1} parent=39 // pred_check
          %p277 = pneg %p134
        $region54: #{_skip_upsample_impl.1} parent=39 // pred_check_branch
          %279 = sbr.rel (%p277) target = $region56
        $region55: #{_skip_upsample_impl.1} parent=39 // pred_region
          %280 = dma.done %s273, 2048
        $region56: #{_skip_upsample_impl.1} parent=39 // pred_fallthru
          _
        %281 = sfence
        %p282 = pneg %p40
        %p283 = pneg %p37
        %p284 = pneg %p61
        %p285 = pneg %p58
        %p286 = pneg %p82
        %p287 = pneg %p79
        %s288 = sand.u32 %s24, 1
        %s289 = scalar_lea.sflag [#allocation8], %s288
        %s290 = sand.u32 %s95, 1
        %s291 = smul.addr %s290, 128
        %s292 = scalar_lea.vmem [#allocation7], %s291
        %p293 = pneg %p108
        %p294 = pneg %p105
        %s295 = sand.u32 %s24, 1
        %s296 = scalar_lea.sflag [#allocation8], %s295
        %s297 = sand.u32 %s121, 1
        %s298 = smul.addr %s297, 128
        %s299 = scalar_lea.vmem [#allocation9], %s298
        %p300 = pneg %p134
        %p301 = pneg %p131
        %p302 = pneg %p160
        %p303 = pneg %p157
        %s304 = sand.u32 %s147, 1
        %s305 = scalar_lea.sflag [#allocation4], %s304
        %s306 = sand.u32 %s147, 1
        %s307 = smul.addr %s306, 128
        %s308 = scalar_lea.vmem [#allocation10], %s307
        %v309 = vld [vmem:[%s267] sm:$0xff]
        %v310 = vld [vmem:[%s267 + $0x8] sm:$0xff]
        %v311 = vld [vmem:[%s267 + $0x10] sm:$0xff]
        %v312 = vld [vmem:[%s267 + $0x18] sm:$0xff]
        %v313 = vld [vmem:[%s267 + $0x20] sm:$0xff]
        %v314 = vld [vmem:[%s267 + $0x28] sm:$0xff]
        %v315 = vld [vmem:[%s267 + $0x30] sm:$0xff]
        %v316 = vld [vmem:[%s267 + $0x38] sm:$0xff]
        %v317 = vld [vmem:[%s267 + $0x40] sm:$0xff]
        %v318 = vld [vmem:[%s267 + $0x48] sm:$0xff]
        %v319 = vld [vmem:[%s267 + $0x50] sm:$0xff]
        %v320 = vld [vmem:[%s267 + $0x58] sm:$0xff]
        %v321 = vld [vmem:[%s267 + $0x60] sm:$0xff]
        %v322 = vld [vmem:[%s267 + $0x68] sm:$0xff]
        %v323 = vld [vmem:[%s267 + $0x70] sm:$0xff]
        %v324 = vld [vmem:[%s267 + $0x78] sm:$0xff]
        %v325 = vld [vmem:[%s2] sm:$0xff]
        %v326 = vld [vmem:[%s2 + $0x8] sm:$0xff]
        %vm327 = vcmask 130048
        %v329 = vsel %vm327, %v309, 0
        %v332 = vsel %vm327, %v310, 0
        %v335 = vsel %vm327, %v311, 0
        %v338 = vsel %vm327, %v312, 0
        %v341 = vsel %vm327, %v313, 0
        %v344 = vsel %vm327, %v314, 0
        %v347 = vsel %vm327, %v315, 0
        %v350 = vsel %vm327, %v316, 0
        %v353 = vsel %vm327, %v317, 0
        %v356 = vsel %vm327, %v318, 0
        %v359 = vsel %vm327, %v319, 0
        %v362 = vsel %vm327, %v320, 0
        %v365 = vsel %vm327, %v321, 0
        %v368 = vsel %vm327, %v322, 0
        %v371 = vsel %vm327, %v323, 0
        %v374 = vsel %vm327, %v324, 0
        %376 = vmatprep.subr.mxu0 0.0
        %377 = vmatpush1.msra.mxu0 %v325
        %378 = vmatprep.subr.mxu0 0.0
        %379 = vmatpush1.msra.mxu0 %v326
        %380 = vmatprep.subr.mxu0 0.0
        %381 = vmatpush1.msra.mxu0 0.0
        %382 = vmatprep.subr.mxu0 0.0
        %383 = vmatpush1.msra.mxu0 0.0
        %384 = vmatprep.subr.mxu0 0.0
        %385 = vmatpush1.msra.mxu0 0.0
        %386 = vmatprep.subr.mxu0 0.0
        %387 = vmatpush1.msra.mxu0 0.0
        %388 = vmatprep.subr.mxu0 0.0
        %389 = vmatpush1.msra.mxu0 0.0
        %390 = vmatprep.subr.mxu0 0.0
        %391 = vmatpush1.msra.mxu0 0.0
        %392 = vmatprep.subr.mxu0 0.0
        %393 = vmatpush1.msra.mxu0 0.0
        %394 = vmatprep.subr.mxu0 0.0
        %395 = vmatpush1.msra.mxu0 0.0
        %396 = vmatprep.subr.mxu0 0.0
        %397 = vmatpush1.msra.mxu0 0.0
        %398 = vmatprep.subr.mxu0 0.0
        %399 = vmatpush1.msra.mxu0 0.0
        %400 = vmatprep.subr.mxu0 0.0
        %401 = vmatpush1.msra.mxu0 0.0
        %402 = vmatprep.subr.mxu0 0.0
        %403 = vmatpush1.msra.mxu0 0.0
        %404 = vmatprep.subr.mxu0 0.0
        %405 = vmatpush1.msra.mxu0 0.0
        %406 = vmatprep.subr.mxu0 0.0
        %407 = vmatpush1.msra.mxu0 0.0
        %408 = vmatprep.subr.mxu0 0.0
        %409 = vmatpush1.msra.mxu0 0.0
        %410 = vmatprep.subr.mxu0 0.0
        %411 = vmatpush1.msra.mxu0 0.0
        %412 = vmatprep.subr.mxu0 0.0
        %413 = vmatpush1.msra.mxu0 0.0
        %414 = vmatprep.subr.mxu0 0.0
        %415 = vmatpush1.msra.mxu0 0.0
        %416 = vmatprep.subr.mxu0 0.0
        %417 = vmatpush1.msra.mxu0 0.0
        %418 = vmatprep.subr.mxu0 0.0
        %419 = vmatpush1.msra.mxu0 0.0
        %420 = vmatprep.subr.mxu0 0.0
        %421 = vmatpush1.msra.mxu0 0.0
        %422 = vmatprep.subr.mxu0 0.0
        %423 = vmatpush1.msra.mxu0 0.0
        %424 = vmatprep.subr.mxu0 0.0
        %425 = vmatpush1.msra.mxu0 0.0
        %426 = vmatprep.subr.mxu0 0.0
        %427 = vmatpush1.msra.mxu0 0.0
        %428 = vmatprep.subr.mxu0 0.0
        %429 = vmatpush1.msra.mxu0 0.0
        %430 = vmatprep.subr.mxu0 0.0
        %431 = vmatpush1.msra.mxu0 0.0
        %432 = vmatprep.subr.mxu0 0.0
        %433 = vmatpush1.msra.mxu0 0.0
        %434 = vmatprep.subr.mxu0 0.0
        %435 = vmatpush1.msra.mxu0 0.0
        %436 = vmatprep.subr.mxu0 0.0
        %437 = vmatpush1.msra.mxu0 0.0
        %438 = vmatprep.subr.mxu0 0.0
        %439 = vmatpush1.msra.mxu0 0.0
        %440 = vmatprep.mubr.f32.mxu0 0.0
        %441 = vmatmul.mubr.f32.gmra.mrb[0].mxu0 %v329
        %v442 = vpop.f32.mrb[0].mxu0
        %v443 = vadd.f32 0.0, %v442
        %v444 = vpop.f32.mrb[0].mxu0
        %445 = vmatprep.mubr.f32.mxu0 0.0
        %446 = vmatmul.mubr.f32.gmra.mrb[0].mxu0 %v332
        %v447 = vpop.f32.mrb[0].mxu0
        %v448 = vadd.f32 0.0, %v447
        %v449 = vpop.f32.mrb[0].mxu0
        %450 = vmatprep.mubr.f32.mxu0 0.0
        %451 = vmatmul.mubr.f32.gmra.mrb[0].mxu0 %v335
        %v452 = vpop.f32.mrb[0].mxu0
        %v453 = vadd.f32 0.0, %v452
        %v454 = vpop.f32.mrb[0].mxu0
        %455 = vmatprep.mubr.f32.mxu0 0.0
        %456 = vmatmul.mubr.f32.gmra.mrb[0].mxu0 %v338
        %v457 = vpop.f32.mrb[0].mxu0
        %v458 = vadd.f32 0.0, %v457
        %v459 = vpop.f32.mrb[0].mxu0
        %460 = vmatprep.mubr.f32.mxu0 0.0
        %461 = vmatmul.mubr.f32.gmra.mrb[0].mxu0 %v341
        %v462 = vpop.f32.mrb[0].mxu0
        %v463 = vadd.f32 0.0, %v462
        %v464 = vpop.f32.mrb[0].mxu0
        %465 = vmatprep.mubr.f32.mxu0 0.0
        %466 = vmatmul.mubr.f32.gmra.mrb[0].mxu0 %v344
        %v467 = vpop.f32.mrb[0].mxu0
        %v468 = vadd.f32 0.0, %v467
        %v469 = vpop.f32.mrb[0].mxu0
        %470 = vmatprep.mubr.f32.mxu0 0.0
        %471 = vmatmul.mubr.f32.gmra.mrb[0].mxu0 %v347
        %v472 = vpop.f32.mrb[0].mxu0
        %v473 = vadd.f32 0.0, %v472
        %v474 = vpop.f32.mrb[0].mxu0
        %475 = vmatprep.mubr.f32.mxu0 0.0
        %476 = vmatmul.mubr.f32.gmra.mrb[0].mxu0 %v350
        %v477 = vpop.f32.mrb[0].mxu0
        %v478 = vadd.f32 0.0, %v477
        %v479 = vpop.f32.mrb[0].mxu0
        %480 = vmatprep.mubr.f32.mxu0 0.0
        %481 = vmatmul.mubr.f32.gmra.mrb[0].mxu0 %v353
        %v482 = vpop.f32.mrb[0].mxu0
        %v483 = vadd.f32 0.0, %v482
        %v484 = vpop.f32.mrb[0].mxu0
        %485 = vmatprep.mubr.f32.mxu0 0.0
        %486 = vmatmul.mubr.f32.gmra.mrb[0].mxu0 %v356
        %v487 = vpop.f32.mrb[0].mxu0
        %v488 = vadd.f32 0.0, %v487
        %v489 = vpop.f32.mrb[0].mxu0
        %490 = vmatprep.mubr.f32.mxu0 0.0
        %491 = vmatmul.mubr.f32.gmra.mrb[0].mxu0 %v359
        %v492 = vpop.f32.mrb[0].mxu0
        %v493 = vadd.f32 0.0, %v492
        %v494 = vpop.f32.mrb[0].mxu0
        %495 = vmatprep.mubr.f32.mxu0 0.0
        %496 = vmatmul.mubr.f32.gmra.mrb[0].mxu0 %v362
        %v497 = vpop.f32.mrb[0].mxu0
        %v498 = vadd.f32 0.0, %v497
        %v499 = vpop.f32.mrb[0].mxu0
        %500 = vmatprep.mubr.f32.mxu0 0.0
        %501 = vmatmul.mubr.f32.gmra.mrb[0].mxu0 %v365
        %v502 = vpop.f32.mrb[0].mxu0
        %v503 = vadd.f32 0.0, %v502
        %v504 = vpop.f32.mrb[0].mxu0
        %505 = vmatprep.mubr.f32.mxu0 0.0
        %506 = vmatmul.mubr.f32.gmra.mrb[0].mxu0 %v368
        %v507 = vpop.f32.mrb[0].mxu0
        %v508 = vadd.f32 0.0, %v507
        %v509 = vpop.f32.mrb[0].mxu0
        %510 = vmatprep.mubr.f32.mxu0 0.0
        %511 = vmatmul.mubr.f32.gmra.mrb[0].mxu0 %v371
        %v512 = vpop.f32.mrb[0].mxu0
        %v513 = vadd.f32 0.0, %v512
        %v514 = vpop.f32.mrb[0].mxu0
        %515 = vmatprep.mubr.f32.mxu0 0.0
        %516 = vmatmul.mubr.f32.gmra.mrb[0].mxu0 %v374
        %v517 = vpop.f32.mrb[0].mxu0
        %v518 = vadd.f32 0.0, %v517
        %v519 = vpop.f32.mrb[0].mxu0
        %520 = vdwg.mxu0
        %s521 = sld [smem:[#allocation2]]
        %v522 = vstv %s521
        %v523 = vmul.f32 %v522, %v443
        %v524 = vmul.f32 %v522, %v448
        %s525 = sld [smem:[#allocation2 + $0x1]]
        %v526 = vstv %s525
        %v527 = vmul.f32 %v526, %v453
        %v528 = vmul.f32 %v526, %v458
        %v529 = vadd.f32 %v523, %v527
        %v530 = vadd.f32 %v524, %v528
        %s531 = sld [smem:[#allocation2 + $0x2]]
        %v532 = vstv %s531
        %v533 = vmul.f32 %v532, %v463
        %v534 = vmul.f32 %v532, %v468
        %v535 = vadd.f32 %v529, %v533
        %v536 = vadd.f32 %v530, %v534
        %s537 = sld [smem:[#allocation2 + $0x3]]
        %v538 = vstv %s537
        %v539 = vmul.f32 %v538, %v473
        %v540 = vmul.f32 %v538, %v478
        %v541 = vadd.f32 %v535, %v539
        %v542 = vadd.f32 %v536, %v540
        %s543 = sld [smem:[#allocation2 + $0x4]]
        %v544 = vstv %s543
        %v545 = vmul.f32 %v544, %v483
        %v546 = vmul.f32 %v544, %v488
        %v547 = vadd.f32 %v541, %v545
        %v548 = vadd.f32 %v542, %v546
        %s549 = sld [smem:[#allocation2 + $0x5]]
        %v550 = vstv %s549
        %v551 = vmul.f32 %v550, %v493
        %v552 = vmul.f32 %v550, %v498
        %v553 = vadd.f32 %v547, %v551
        %v554 = vadd.f32 %v548, %v552
        %s555 = sld [smem:[#allocation2 + $0x6]]
        %v556 = vstv %s555
        %v557 = vmul.f32 %v556, %v503
        %v558 = vmul.f32 %v556, %v508
        %v559 = vadd.f32 %v553, %v557
        %v560 = vadd.f32 %v554, %v558
        %s561 = sld [smem:[#allocation2 + $0x7]]
        %v562 = vstv %s561
        %v563 = vmul.f32 %v562, %v513
        %v564 = vmul.f32 %v562, %v518
        %v565 = vadd.f32 %v559, %v563
        %v566 = vadd.f32 %v560, %v564
        %v567 = vld [vmem:[#allocation6] sm:$0xff]
        %v568 = vld [vmem:[#allocation6 + $0x8] sm:$0xff]
        %v569 = vld [vmem:[#allocation6 + $0x10] sm:$0xff]
        %v570 = vld [vmem:[#allocation6 + $0x18] sm:$0xff]
        %v571 = vld [vmem:[%s276] sm:$0xff]
        %v572 = vld [vmem:[%s276 + $0x8] sm:$0xff]
        %v573 = vld [vmem:[%s276 + $0x10] sm:$0xff]
        %v574 = vld [vmem:[%s276 + $0x18] sm:$0xff]
        %v576 = vsel %vm327, %v567, 0
        %v579 = vsel %vm327, %v568, 0
        %v582 = vsel %vm327, %v569, 0
        %v585 = vsel %vm327, %v570, 0
        %587 = vmatprep.subr.mxu0 0.0
        %588 = vmatpush1.msra.mxu0 %v565
        %589 = vmatprep.subr.mxu0 0.0
        %590 = vmatpush1.msra.mxu0 %v566
        %591 = vmatprep.subr.mxu0 0.0
        %592 = vmatpush1.msra.mxu0 0.0
        %593 = vmatprep.subr.mxu0 0.0
        %594 = vmatpush1.msra.mxu0 0.0
        %595 = vmatprep.subr.mxu0 0.0
        %596 = vmatpush1.msra.mxu0 0.0
        %597 = vmatprep.subr.mxu0 0.0
        %598 = vmatpush1.msra.mxu0 0.0
        %599 = vmatprep.subr.mxu0 0.0
        %600 = vmatpush1.msra.mxu0 0.0
        %601 = vmatprep.subr.mxu0 0.0
        %602 = vmatpush1.msra.mxu0 0.0
        %603 = vmatprep.subr.mxu0 0.0
        %604 = vmatpush1.msra.mxu0 0.0
        %605 = vmatprep.subr.mxu0 0.0
        %606 = vmatpush1.msra.mxu0 0.0
        %607 = vmatprep.subr.mxu0 0.0
        %608 = vmatpush1.msra.mxu0 0.0
        %609 = vmatprep.subr.mxu0 0.0
        %610 = vmatpush1.msra.mxu0 0.0
        %611 = vmatprep.subr.mxu0 0.0
        %612 = vmatpush1.msra.mxu0 0.0
        %613 = vmatprep.subr.mxu0 0.0
        %614 = vmatpush1.msra.mxu0 0.0
        %615 = vmatprep.subr.mxu0 0.0
        %616 = vmatpush1.msra.mxu0 0.0
        %617 = vmatprep.subr.mxu0 0.0
        %618 = vmatpush1.msra.mxu0 0.0
        %619 = vmatprep.subr.mxu0 0.0
        %620 = vmatpush1.msra.mxu0 0.0
        %621 = vmatprep.subr.mxu0 0.0
        %622 = vmatpush1.msra.mxu0 0.0
        %623 = vmatprep.subr.mxu0 0.0
        %624 = vmatpush1.msra.mxu0 0.0
        %625 = vmatprep.subr.mxu0 0.0
        %626 = vmatpush1.msra.mxu0 0.0
        %627 = vmatprep.subr.mxu0 0.0
        %628 = vmatpush1.msra.mxu0 0.0
        %629 = vmatprep.subr.mxu0 0.0
        %630 = vmatpush1.msra.mxu0 0.0
        %631 = vmatprep.subr.mxu0 0.0
        %632 = vmatpush1.msra.mxu0 0.0
        %633 = vmatprep.subr.mxu0 0.0
        %634 = vmatpush1.msra.mxu0 0.0
        %635 = vmatprep.subr.mxu0 0.0
        %636 = vmatpush1.msra.mxu0 0.0
        %637 = vmatprep.subr.mxu0 0.0
        %638 = vmatpush1.msra.mxu0 0.0
        %639 = vmatprep.subr.mxu0 0.0
        %640 = vmatpush1.msra.mxu0 0.0
        %641 = vmatprep.subr.mxu0 0.0
        %642 = vmatpush1.msra.mxu0 0.0
        %643 = vmatprep.subr.mxu0 0.0
        %644 = vmatpush1.msra.mxu0 0.0
        %645 = vmatprep.subr.mxu0 0.0
        %646 = vmatpush1.msra.mxu0 0.0
        %647 = vmatprep.subr.mxu0 0.0
        %648 = vmatpush1.msra.mxu0 0.0
        %649 = vmatprep.subr.mxu0 0.0
        %650 = vmatpush1.msra.mxu0 0.0
        %651 = vmatprep.mubr.f32.mxu0 0.0
        %652 = vmatmul.mubr.f32.gmra.mrb[0].mxu0 %v576
        %v653 = vpop.f32.mrb[0].mxu0
        %v654 = vadd.f32 %v571, %v653
        %v655 = vpop.f32.mrb[0].mxu0
        %656 = vmatprep.mubr.f32.mxu0 0.0
        %657 = vmatmul.mubr.f32.gmra.mrb[0].mxu0 %v579
        %v658 = vpop.f32.mrb[0].mxu0
        %v659 = vadd.f32 %v572, %v658
        %v660 = vpop.f32.mrb[0].mxu0
        %661 = vmatprep.mubr.f32.mxu0 0.0
        %662 = vmatmul.mubr.f32.gmra.mrb[0].mxu0 %v582
        %v663 = vpop.f32.mrb[0].mxu0
        %v664 = vadd.f32 %v573, %v663
        %v665 = vpop.f32.mrb[0].mxu0
        %666 = vmatprep.mubr.f32.mxu0 0.0
        %667 = vmatmul.mubr.f32.gmra.mrb[0].mxu0 %v585
        %v668 = vpop.f32.mrb[0].mxu0
        %v669 = vadd.f32 %v574, %v668
        %v670 = vpop.f32.mrb[0].mxu0
        %671 = vdwg.mxu0
        %vm672 = vcmask 261120
        %673 = vst.msk [vmem:[%s308] sm:$0xff] %vm672, %v654
        %674 = vst.msk [vmem:[%s308 + $0x8] sm:$0xff] %vm672, %v659
        %675 = vst.msk [vmem:[%s308 + $0x10] sm:$0xff] %vm672, %v664
        %676 = vst.msk [vmem:[%s308 + $0x18] sm:$0xff] %vm672, %v669
        %s677 = sld [smem:[#allocation2 + $0x80]]
        %v678 = vstv %s677
        %v679 = vmul.f32 %v678, %v443
        %v680 = vmul.f32 %v678, %v448
        %s681 = sld [smem:[#allocation2 + $0x81]]
        %v682 = vstv %s681
        %v683 = vmul.f32 %v682, %v453
        %v684 = vmul.f32 %v682, %v458
        %v685 = vadd.f32 %v679, %v683
        %v686 = vadd.f32 %v680, %v684
        %s687 = sld [smem:[#allocation2 + $0x82]]
        %v688 = vstv %s687
        %v689 = vmul.f32 %v688, %v463
        %v690 = vmul.f32 %v688, %v468
        %v691 = vadd.f32 %v685, %v689
        %v692 = vadd.f32 %v686, %v690
        %s693 = sld [smem:[#allocation2 + $0x83]]
        %v694 = vstv %s693
        %v695 = vmul.f32 %v694, %v473
        %v696 = vmul.f32 %v694, %v478
        %v697 = vadd.f32 %v691, %v695
        %v698 = vadd.f32 %v692, %v696
        %s699 = sld [smem:[#allocation2 + $0x84]]
        %v700 = vstv %s699
        %v701 = vmul.f32 %v700, %v483
        %v702 = vmul.f32 %v700, %v488
        %v703 = vadd.f32 %v697, %v701
        %v704 = vadd.f32 %v698, %v702
        %s705 = sld [smem:[#allocation2 + $0x85]]
        %v706 = vstv %s705
        %v707 = vmul.f32 %v706, %v493
        %v708 = vmul.f32 %v706, %v498
        %v709 = vadd.f32 %v703, %v707
        %v710 = vadd.f32 %v704, %v708
        %s711 = sld [smem:[#allocation2 + $0x86]]
        %v712 = vstv %s711
        %v713 = vmul.f32 %v712, %v503
        %v714 = vmul.f32 %v712, %v508
        %v715 = vadd.f32 %v709, %v713
        %v716 = vadd.f32 %v710, %v714
        %s717 = sld [smem:[#allocation2 + $0x87]]
        %v718 = vstv %s717
        %v719 = vmul.f32 %v718, %v513
        %v720 = vmul.f32 %v718, %v518
        %v721 = vadd.f32 %v715, %v719
        %v722 = vadd.f32 %v716, %v720
        %v723 = vld [vmem:[#allocation6] sm:$0xff]
        %v724 = vld [vmem:[#allocation6 + $0x8] sm:$0xff]
        %v725 = vld [vmem:[#allocation6 + $0x10] sm:$0xff]
        %v726 = vld [vmem:[#allocation6 + $0x18] sm:$0xff]
        %v727 = vld [vmem:[%s276 + $0x20] sm:$0xff]
        %v728 = vld [vmem:[%s276 + $0x28] sm:$0xff]
        %v729 = vld [vmem:[%s276 + $0x30] sm:$0xff]
        %v730 = vld [vmem:[%s276 + $0x38] sm:$0xff]
        %v732 = vsel %vm327, %v723, 0
        %v735 = vsel %vm327, %v724, 0
        %v738 = vsel %vm327, %v725, 0
        %v741 = vsel %vm327, %v726, 0
        %743 = vmatprep.subr.mxu0 0.0
        %744 = vmatpush1.msra.mxu0 %v721
        %745 = vmatprep.subr.mxu0 0.0
        %746 = vmatpush1.msra.mxu0 %v722
        %747 = vmatprep.subr.mxu0 0.0
        %748 = vmatpush1.msra.mxu0 0.0
        %749 = vmatprep.subr.mxu0 0.0
        %750 = vmatpush1.msra.mxu0 0.0
        %751 = vmatprep.subr.mxu0 0.0
        %752 = vmatpush1.msra.mxu0 0.0
        %753 = vmatprep.subr.mxu0 0.0
        %754 = vmatpush1.msra.mxu0 0.0
        %755 = vmatprep.subr.mxu0 0.0
        %756 = vmatpush1.msra.mxu0 0.0
        %757 = vmatprep.subr.mxu0 0.0
        %758 = vmatpush1.msra.mxu0 0.0
        %759 = vmatprep.subr.mxu0 0.0
        %760 = vmatpush1.msra.mxu0 0.0
        %761 = vmatprep.subr.mxu0 0.0
        %762 = vmatpush1.msra.mxu0 0.0
        %763 = vmatprep.subr.mxu0 0.0
        %764 = vmatpush1.msra.mxu0 0.0
        %765 = vmatprep.subr.mxu0 0.0
        %766 = vmatpush1.msra.mxu0 0.0
        %767 = vmatprep.subr.mxu0 0.0
        %768 = vmatpush1.msra.mxu0 0.0
        %769 = vmatprep.subr.mxu0 0.0
        %770 = vmatpush1.msra.mxu0 0.0
        %771 = vmatprep.subr.mxu0 0.0
        %772 = vmatpush1.msra.mxu0 0.0
        %773 = vmatprep.subr.mxu0 0.0
        %774 = vmatpush1.msra.mxu0 0.0
        %775 = vmatprep.subr.mxu0 0.0
        %776 = vmatpush1.msra.mxu0 0.0
        %777 = vmatprep.subr.mxu0 0.0
        %778 = vmatpush1.msra.mxu0 0.0
        %779 = vmatprep.subr.mxu0 0.0
        %780 = vmatpush1.msra.mxu0 0.0
        %781 = vmatprep.subr.mxu0 0.0
        %782 = vmatpush1.msra.mxu0 0.0
        %783 = vmatprep.subr.mxu0 0.0
        %784 = vmatpush1.msra.mxu0 0.0
        %785 = vmatprep.subr.mxu0 0.0
        %786 = vmatpush1.msra.mxu0 0.0
        %787 = vmatprep.subr.mxu0 0.0
        %788 = vmatpush1.msra.mxu0 0.0
        %789 = vmatprep.subr.mxu0 0.0
        %790 = vmatpush1.msra.mxu0 0.0
        %791 = vmatprep.subr.mxu0 0.0
        %792 = vmatpush1.msra.mxu0 0.0
        %793 = vmatprep.subr.mxu0 0.0
        %794 = vmatpush1.msra.mxu0 0.0
        %795 = vmatprep.subr.mxu0 0.0
        %796 = vmatpush1.msra.mxu0 0.0
        %797 = vmatprep.subr.mxu0 0.0
        %798 = vmatpush1.msra.mxu0 0.0
        %799 = vmatprep.subr.mxu0 0.0
        %800 = vmatpush1.msra.mxu0 0.0
        %801 = vmatprep.subr.mxu0 0.0
        %802 = vmatpush1.msra.mxu0 0.0
        %803 = vmatprep.subr.mxu0 0.0
        %804 = vmatpush1.msra.mxu0 0.0
        %805 = vmatprep.subr.mxu0 0.0
        %806 = vmatpush1.msra.mxu0 0.0
        %807 = vmatprep.mubr.f32.mxu0 0.0
        %808 = vmatmul.mubr.f32.gmra.mrb[0].mxu0 %v732
        %v809 = vpop.f32.mrb[0].mxu0
        %v810 = vadd.f32 %v727, %v809
        %v811 = vpop.f32.mrb[0].mxu0
        %812 = vmatprep.mubr.f32.mxu0 0.0
        %813 = vmatmul.mubr.f32.gmra.mrb[0].mxu0 %v735
        %v814 = vpop.f32.mrb[0].mxu0
        %v815 = vadd.f32 %v728, %v814
        %v816 = vpop.f32.mrb[0].mxu0
        %817 = vmatprep.mubr.f32.mxu0 0.0
        %818 = vmatmul.mubr.f32.gmra.mrb[0].mxu0 %v738
        %v819 = vpop.f32.mrb[0].mxu0
        %v820 = vadd.f32 %v729, %v819
        %v821 = vpop.f32.mrb[0].mxu0
        %822 = vmatprep.mubr.f32.mxu0 0.0
        %823 = vmatmul.mubr.f32.gmra.mrb[0].mxu0 %v741
        %v824 = vpop.f32.mrb[0].mxu0
        %v825 = vadd.f32 %v730, %v824
        %v826 = vpop.f32.mrb[0].mxu0
        %827 = vdwg.mxu0
        %828 = vst.msk [vmem:[%s308 + $0x20] sm:$0xff] %vm672, %v810
        %829 = vst.msk [vmem:[%s308 + $0x28] sm:$0xff] %vm672, %v815
        %830 = vst.msk [vmem:[%s308 + $0x30] sm:$0xff] %vm672, %v820
        %831 = vst.msk [vmem:[%s308 + $0x38] sm:$0xff] %vm672, %v825
        %s832 = sld [smem:[#allocation2 + $0x100]]
        %v833 = vstv %s832
        %v834 = vmul.f32 %v833, %v443
        %v835 = vmul.f32 %v833, %v448
        %s836 = sld [smem:[#allocation2 + $0x101]]
        %v837 = vstv %s836
        %v838 = vmul.f32 %v837, %v453
        %v839 = vmul.f32 %v837, %v458
        %v840 = vadd.f32 %v834, %v838
        %v841 = vadd.f32 %v835, %v839
        %s842 = sld [smem:[#allocation2 + $0x102]]
        %v843 = vstv %s842
        %v844 = vmul.f32 %v843, %v463
        %v845 = vmul.f32 %v843, %v468
        %v846 = vadd.f32 %v840, %v844
        %v847 = vadd.f32 %v841, %v845
        %s848 = sld [smem:[#allocation2 + $0x103]]
        %v849 = vstv %s848
        %v850 = vmul.f32 %v849, %v473
        %v851 = vmul.f32 %v849, %v478
        %v852 = vadd.f32 %v846, %v850
        %v853 = vadd.f32 %v847, %v851
        %s854 = sld [smem:[#allocation2 + $0x104]]
        %v855 = vstv %s854
        %v856 = vmul.f32 %v855, %v483
        %v857 = vmul.f32 %v855, %v488
        %v858 = vadd.f32 %v852, %v856
        %v859 = vadd.f32 %v853, %v857
        %s860 = sld [smem:[#allocation2 + $0x105]]
        %v861 = vstv %s860
        %v862 = vmul.f32 %v861, %v493
        %v863 = vmul.f32 %v861, %v498
        %v864 = vadd.f32 %v858, %v862
        %v865 = vadd.f32 %v859, %v863
        %s866 = sld [smem:[#allocation2 + $0x106]]
        %v867 = vstv %s866
        %v868 = vmul.f32 %v867, %v503
        %v869 = vmul.f32 %v867, %v508
        %v870 = vadd.f32 %v864, %v868
        %v871 = vadd.f32 %v865, %v869
        %s872 = sld [smem:[#allocation2 + $0x107]]
        %v873 = vstv %s872
        %v874 = vmul.f32 %v873, %v513
        %v875 = vmul.f32 %v873, %v518
        %v876 = vadd.f32 %v870, %v874
        %v877 = vadd.f32 %v871, %v875
        %v878 = vld [vmem:[#allocation6] sm:$0xff]
        %v879 = vld [vmem:[#allocation6 + $0x8] sm:$0xff]
        %v880 = vld [vmem:[#allocation6 + $0x10] sm:$0xff]
        %v881 = vld [vmem:[#allocation6 + $0x18] sm:$0xff]
        %v882 = vld [vmem:[%s276 + $0x40] sm:$0xff]
        %v883 = vld [vmem:[%s276 + $0x48] sm:$0xff]
        %v884 = vld [vmem:[%s276 + $0x50] sm:$0xff]
        %v885 = vld [vmem:[%s276 + $0x58] sm:$0xff]
        %v887 = vsel %vm327, %v878, 0
        %v890 = vsel %vm327, %v879, 0
        %v893 = vsel %vm327, %v880, 0
        %v896 = vsel %vm327, %v881, 0
        %898 = vmatprep.subr.mxu0 0.0
        %899 = vmatpush1.msra.mxu0 %v876
        %900 = vmatprep.subr.mxu0 0.0
        %901 = vmatpush1.msra.mxu0 %v877
        %902 = vmatprep.subr.mxu0 0.0
        %903 = vmatpush1.msra.mxu0 0.0
        %904 = vmatprep.subr.mxu0 0.0
        %905 = vmatpush1.msra.mxu0 0.0
        %906 = vmatprep.subr.mxu0 0.0
        %907 = vmatpush1.msra.mxu0 0.0
        %908 = vmatprep.subr.mxu0 0.0
        %909 = vmatpush1.msra.mxu0 0.0
        %910 = vmatprep.subr.mxu0 0.0
        %911 = vmatpush1.msra.mxu0 0.0
        %912 = vmatprep.subr.mxu0 0.0
        %913 = vmatpush1.msra.mxu0 0.0
        %914 = vmatprep.subr.mxu0 0.0
        %915 = vmatpush1.msra.mxu0 0.0
        %916 = vmatprep.subr.mxu0 0.0
        %917 = vmatpush1.msra.mxu0 0.0
        %918 = vmatprep.subr.mxu0 0.0
        %919 = vmatpush1.msra.mxu0 0.0
        %920 = vmatprep.subr.mxu0 0.0
        %921 = vmatpush1.msra.mxu0 0.0
        %922 = vmatprep.subr.mxu0 0.0
        %923 = vmatpush1.msra.mxu0 0.0
        %924 = vmatprep.subr.mxu0 0.0
        %925 = vmatpush1.msra.mxu0 0.0
        %926 = vmatprep.subr.mxu0 0.0
        %927 = vmatpush1.msra.mxu0 0.0
        %928 = vmatprep.subr.mxu0 0.0
        %929 = vmatpush1.msra.mxu0 0.0
        %930 = vmatprep.subr.mxu0 0.0
        %931 = vmatpush1.msra.mxu0 0.0
        %932 = vmatprep.subr.mxu0 0.0
        %933 = vmatpush1.msra.mxu0 0.0
        %934 = vmatprep.subr.mxu0 0.0
        %935 = vmatpush1.msra.mxu0 0.0
        %936 = vmatprep.subr.mxu0 0.0
        %937 = vmatpush1.msra.mxu0 0.0
        %938 = vmatprep.subr.mxu0 0.0
        %939 = vmatpush1.msra.mxu0 0.0
        %940 = vmatprep.subr.mxu0 0.0
        %941 = vmatpush1.msra.mxu0 0.0
        %942 = vmatprep.subr.mxu0 0.0
        %943 = vmatpush1.msra.mxu0 0.0
        %944 = vmatprep.subr.mxu0 0.0
        %945 = vmatpush1.msra.mxu0 0.0
        %946 = vmatprep.subr.mxu0 0.0
        %947 = vmatpush1.msra.mxu0 0.0
        %948 = vmatprep.subr.mxu0 0.0
        %949 = vmatpush1.msra.mxu0 0.0
        %950 = vmatprep.subr.mxu0 0.0
        %951 = vmatpush1.msra.mxu0 0.0
        %952 = vmatprep.subr.mxu0 0.0
        %953 = vmatpush1.msra.mxu0 0.0
        %954 = vmatprep.subr.mxu0 0.0
        %955 = vmatpush1.msra.mxu0 0.0
        %956 = vmatprep.subr.mxu0 0.0
        %957 = vmatpush1.msra.mxu0 0.0
        %958 = vmatprep.subr.mxu0 0.0
        %959 = vmatpush1.msra.mxu0 0.0
        %960 = vmatprep.subr.mxu0 0.0
        %961 = vmatpush1.msra.mxu0 0.0
        %962 = vmatprep.mubr.f32.mxu0 0.0
        %963 = vmatmul.mubr.f32.gmra.mrb[0].mxu0 %v887
        %v964 = vpop.f32.mrb[0].mxu0
        %v965 = vadd.f32 %v882, %v964
        %v966 = vpop.f32.mrb[0].mxu0
        %967 = vmatprep.mubr.f32.mxu0 0.0
        %968 = vmatmul.mubr.f32.gmra.mrb[0].mxu0 %v890
        %v969 = vpop.f32.mrb[0].mxu0
        %v970 = vadd.f32 %v883, %v969
        %v971 = vpop.f32.mrb[0].mxu0
        %972 = vmatprep.mubr.f32.mxu0 0.0
        %973 = vmatmul.mubr.f32.gmra.mrb[0].mxu0 %v893
        %v974 = vpop.f32.mrb[0].mxu0
        %v975 = vadd.f32 %v884, %v974
        %v976 = vpop.f32.mrb[0].mxu0
        %977 = vmatprep.mubr.f32.mxu0 0.0
        %978 = vmatmul.mubr.f32.gmra.mrb[0].mxu0 %v896
        %v979 = vpop.f32.mrb[0].mxu0
        %v980 = vadd.f32 %v885, %v979
        %v981 = vpop.f32.mrb[0].mxu0
        %982 = vdwg.mxu0
        %983 = vst.msk [vmem:[%s308 + $0x40] sm:$0xff] %vm672, %v965
        %984 = vst.msk [vmem:[%s308 + $0x48] sm:$0xff] %vm672, %v970
        %985 = vst.msk [vmem:[%s308 + $0x50] sm:$0xff] %vm672, %v975
        %986 = vst.msk [vmem:[%s308 + $0x58] sm:$0xff] %vm672, %v980
        %s987 = sld [smem:[#allocation2 + $0x180]]
        %v988 = vstv %s987
        %v989 = vmul.f32 %v988, %v443
        %v990 = vmul.f32 %v988, %v448
        %s991 = sld [smem:[#allocation2 + $0x181]]
        %v992 = vstv %s991
        %v993 = vmul.f32 %v992, %v453
        %v994 = vmul.f32 %v992, %v458
        %v995 = vadd.f32 %v989, %v993
        %v996 = vadd.f32 %v990, %v994
        %s997 = sld [smem:[#allocation2 + $0x182]]
        %v998 = vstv %s997
        %v999 = vmul.f32 %v998, %v463
        %v1000 = vmul.f32 %v998, %v468
        %v1001 = vadd.f32 %v995, %v999
        %v1002 = vadd.f32 %v996, %v1000
        %s1003 = sld [smem:[#allocation2 + $0x183]]
        %v1004 = vstv %s1003
        %v1005 = vmul.f32 %v1004, %v473
        %v1006 = vmul.f32 %v1004, %v478
        %v1007 = vadd.f32 %v1001, %v1005
        %v1008 = vadd.f32 %v1002, %v1006
        %s1009 = sld [smem:[#allocation2 + $0x184]]
        %v1010 = vstv %s1009
        %v1011 = vmul.f32 %v1010, %v483
        %v1012 = vmul.f32 %v1010, %v488
        %v1013 = vadd.f32 %v1007, %v1011
        %v1014 = vadd.f32 %v1008, %v1012
        %s1015 = sld [smem:[#allocation2 + $0x185]]
        %v1016 = vstv %s1015
        %v1017 = vmul.f32 %v1016, %v493
        %v1018 = vmul.f32 %v1016, %v498
        %v1019 = vadd.f32 %v1013, %v1017
        %v1020 = vadd.f32 %v1014, %v1018
        %s1021 = sld [smem:[#allocation2 + $0x186]]
        %v1022 = vstv %s1021
        %v1023 = vmul.f32 %v1022, %v503
        %v1024 = vmul.f32 %v1022, %v508
        %v1025 = vadd.f32 %v1019, %v1023
        %v1026 = vadd.f32 %v1020, %v1024
        %s1027 = sld [smem:[#allocation2 + $0x187]]
        %v1028 = vstv %s1027
        %v1029 = vmul.f32 %v1028, %v513
        %v1030 = vmul.f32 %v1028, %v518
        %v1031 = vadd.f32 %v1025, %v1029
        %v1032 = vadd.f32 %v1026, %v1030
        %v1033 = vld [vmem:[#allocation6] sm:$0xff]
        %v1034 = vld [vmem:[#allocation6 + $0x8] sm:$0xff]
        %v1035 = vld [vmem:[#allocation6 + $0x10] sm:$0xff]
        %v1036 = vld [vmem:[#allocation6 + $0x18] sm:$0xff]
        %v1037 = vld [vmem:[%s276 + $0x60] sm:$0xff]
        %v1038 = vld [vmem:[%s276 + $0x68] sm:$0xff]
        %v1039 = vld [vmem:[%s276 + $0x70] sm:$0xff]
        %v1040 = vld [vmem:[%s276 + $0x78] sm:$0xff]
        %v1042 = vsel %vm327, %v1033, 0
        %v1045 = vsel %vm327, %v1034, 0
        %v1048 = vsel %vm327, %v1035, 0
        %v1051 = vsel %vm327, %v1036, 0
        %1053 = vmatprep.subr.mxu0 0.0
        %1054 = vmatpush1.msra.mxu0 %v1031
        %1055 = vmatprep.subr.mxu0 0.0
        %1056 = vmatpush1.msra.mxu0 %v1032
        %1057 = vmatprep.subr.mxu0 0.0
        %1058 = vmatpush1.msra.mxu0 0.0
        %1059 = vmatprep.subr.mxu0 0.0
        %1060 = vmatpush1.msra.mxu0 0.0
        %1061 = vmatprep.subr.mxu0 0.0
        %1062 = vmatpush1.msra.mxu0 0.0
        %1063 = vmatprep.subr.mxu0 0.0
        %1064 = vmatpush1.msra.mxu0 0.0
        %1065 = vmatprep.subr.mxu0 0.0
        %1066 = vmatpush1.msra.mxu0 0.0
        %1067 = vmatprep.subr.mxu0 0.0
        %1068 = vmatpush1.msra.mxu0 0.0
        %1069 = vmatprep.subr.mxu0 0.0
        %1070 = vmatpush1.msra.mxu0 0.0
        %1071 = vmatprep.subr.mxu0 0.0
        %1072 = vmatpush1.msra.mxu0 0.0
        %1073 = vmatprep.subr.mxu0 0.0
        %1074 = vmatpush1.msra.mxu0 0.0
        %1075 = vmatprep.subr.mxu0 0.0
        %1076 = vmatpush1.msra.mxu0 0.0
        %1077 = vmatprep.subr.mxu0 0.0
        %1078 = vmatpush1.msra.mxu0 0.0
        %1079 = vmatprep.subr.mxu0 0.0
        %1080 = vmatpush1.msra.mxu0 0.0
        %1081 = vmatprep.subr.mxu0 0.0
        %1082 = vmatpush1.msra.mxu0 0.0
        %1083 = vmatprep.subr.mxu0 0.0
        %1084 = vmatpush1.msra.mxu0 0.0
        %1085 = vmatprep.subr.mxu0 0.0
        %1086 = vmatpush1.msra.mxu0 0.0
        %1087 = vmatprep.subr.mxu0 0.0
        %1088 = vmatpush1.msra.mxu0 0.0
        %1089 = vmatprep.subr.mxu0 0.0
        %1090 = vmatpush1.msra.mxu0 0.0
        %1091 = vmatprep.subr.mxu0 0.0
        %1092 = vmatpush1.msra.mxu0 0.0
        %1093 = vmatprep.subr.mxu0 0.0
        %1094 = vmatpush1.msra.mxu0 0.0
        %1095 = vmatprep.subr.mxu0 0.0
        %1096 = vmatpush1.msra.mxu0 0.0
        %1097 = vmatprep.subr.mxu0 0.0
        %1098 = vmatpush1.msra.mxu0 0.0
        %1099 = vmatprep.subr.mxu0 0.0
        %1100 = vmatpush1.msra.mxu0 0.0
        %1101 = vmatprep.subr.mxu0 0.0
        %1102 = vmatpush1.msra.mxu0 0.0
        %1103 = vmatprep.subr.mxu0 0.0
        %1104 = vmatpush1.msra.mxu0 0.0
        %1105 = vmatprep.subr.mxu0 0.0
        %1106 = vmatpush1.msra.mxu0 0.0
        %1107 = vmatprep.subr.mxu0 0.0
        %1108 = vmatpush1.msra.mxu0 0.0
        %1109 = vmatprep.subr.mxu0 0.0
        %1110 = vmatpush1.msra.mxu0 0.0
        %1111 = vmatprep.subr.mxu0 0.0
        %1112 = vmatpush1.msra.mxu0 0.0
        %1113 = vmatprep.subr.mxu0 0.0
        %1114 = vmatpush1.msra.mxu0 0.0
        %1115 = vmatprep.subr.mxu0 0.0
        %1116 = vmatpush1.msra.mxu0 0.0
        %1117 = vmatprep.mubr.f32.mxu0 0.0
        %1118 = vmatmul.mubr.f32.gmra.mrb[0].mxu0 %v1042
        %v1119 = vpop.f32.mrb[0].mxu0
        %v1120 = vadd.f32 %v1037, %v1119
        %v1121 = vpop.f32.mrb[0].mxu0
        %1122 = vmatprep.mubr.f32.mxu0 0.0
        %1123 = vmatmul.mubr.f32.gmra.mrb[0].mxu0 %v1045
        %v1124 = vpop.f32.mrb[0].mxu0
        %v1125 = vadd.f32 %v1038, %v1124
        %v1126 = vpop.f32.mrb[0].mxu0
        %1127 = vmatprep.mubr.f32.mxu0 0.0
        %1128 = vmatmul.mubr.f32.gmra.mrb[0].mxu0 %v1048
        %v1129 = vpop.f32.mrb[0].mxu0
        %v1130 = vadd.f32 %v1039, %v1129
        %v1131 = vpop.f32.mrb[0].mxu0
        %1132 = vmatprep.mubr.f32.mxu0 0.0
        %1133 = vmatmul.mubr.f32.gmra.mrb[0].mxu0 %v1051
        %v1134 = vpop.f32.mrb[0].mxu0
        %v1135 = vadd.f32 %v1040, %v1134
        %v1136 = vpop.f32.mrb[0].mxu0
        %1137 = vdwg.mxu0
        %1138 = vst.msk [vmem:[%s308 + $0x60] sm:$0xff] %vm672, %v1120
        %1139 = vst.msk [vmem:[%s308 + $0x68] sm:$0xff] %vm672, %v1125
        %1140 = vst.msk [vmem:[%s308 + $0x70] sm:$0xff] %vm672, %v1130
        %1141 = vst.msk [vmem:[%s308 + $0x78] sm:$0xff] %vm672, %v1135
        %s1142 = sand.u32 %s147, 1
        %s1143 = scalar_lea.sflag [#allocation4], %s1142
        %s1144 = sand.u32 %s147, 1
        %s1145 = smul.addr %s1144, 128
        %s1146 = scalar_lea.vmem [#allocation10], %s1145
        // Predicated region
        $region57: #{_skip_upsample_impl.1} parent=39 // pred_check
          %p1147 = pneg %p157
        $region58: #{_skip_upsample_impl.1} parent=39 // pred_check_branch
          %1149 = sbr.rel (%p1147) target = $region60
        $region59: #{_skip_upsample_impl.1} parent=39 // pred_region
          %s1151 = ssub.s32 2048, 2048
          %1152 = vsyncadd %s1143, %s1151
          %s1153 = smul.addr %s24, 16
          %s1154 = smul.addr %s1153, 128
          %s1155 = scalar_lea.hbm %s5, %s1154
          %s1156 = sshll.u32 %s1146, 4
          %s1157 = int_to_ptr.vmem [resolvable:$true] %s1156
          %1162 = dma.vmem_to_hbm [thread:$0]  %s1157, 2048, %s1155, %s1143, 128, 128, 8
        $region60: #{_skip_upsample_impl.1} parent=39 // pred_fallthru
          _
      $region40: #{_skip_upsample_impl.1} parent=5 // pred_fallthru
        _
      %p1163 = scmp.le.s32.totalorder 2, %s19
      // Predicated region
      $region61: #{_skip_upsample_impl.1} parent=5 // pred_check
        %p1164 = pneg %p1163
      $region62: #{_skip_upsample_impl.1} parent=5 // pred_check_branch
        %1166 = sbr.rel (%p1164) target = $region64
      $region63: #{_skip_upsample_impl.1} parent=5 // pred_region
        %s1167 = ssub.s32 %s19, 2
        // Predicated region
        $region65: #{_skip_upsample_impl.1} parent=63 // pred_check
          %p1168 = pneg %p163
        $region66: #{_skip_upsample_impl.1} parent=63 // pred_check_branch
          %1170 = sbr.rel (%p1168) target = $region68
        $region67: #{_skip_upsample_impl.1} parent=63 // pred_region
          %s1171 = sand.u32 %s148, 1
          %s1172 = scalar_lea.sflag [#allocation4], %s1171
          %s1173 = sand.u32 %s148, 1
          %s1174 = smul.addr %s1173, 128
          %s1175 = scalar_lea.vmem [#allocation10], %s1174
          %1176 = dma.done %s1172, 2048
        $region68: #{_skip_upsample_impl.1} parent=63 // pred_fallthru
          _
      $region64: #{_skip_upsample_impl.1} parent=5 // pred_fallthru
        _
    $region6: #{_skip_upsample_impl.1} parent=1 // loop_footer
      %s23 = sadd.s32 1, %s19
    $region7: #{_skip_upsample_impl.1} parent=1 // loop_footer_branch
      %18 = sbr.rel target = $region3
    $region8: #{_skip_upsample_impl.1} parent=1 // loop_exit
      _
    %1177 = vsyncpa [#allocation3], 1
    %s1178 = scalar_lea.sflag [#allocation3], 1
    %1179 = vsyncpa %s1178, 1
    %1180 = vsyncpa [#allocation8], 1
    %s1181 = scalar_lea.sflag [#allocation8], 1
    %1182 = vsyncpa %s1181, 1
    %1183 = vsyncpa [#allocation4], 1
    %s1184 = scalar_lea.sflag [#allocation4], 1
    %1185 = vsyncpa %s1184, 1
    %1186 = vsyncpa [#allocation5], 1
    %s1187 = scalar_lea.sflag [#allocation5], 1
    %1188 = vsyncpa %s1187, 1

</llo_original>
